<compile_context>
chip_gen: v6e
topology: v6e:2x2x1
jax: 0.10.0
libtpu: 0.0.40
codegen_flags: <defaults>
</compile_context>

<pallas_src>
import functools

import jax
import jax.numpy as jnp
import numpy as np
from jax.experimental import pallas as pl
from jax.experimental.pallas import tpu as pltpu

NT_PAD = 8        # padded number of target boxes per image (sublane slots/image)
NP_PAD = 128      # padded number of prediction boxes per image (lane axis)
IMG_BLOCK = 8     # images processed per grid step (leading untiled dim)
BIG = 1e8         # sentinel coordinate; real coordinates must be << BIG


def _iou_best_match_kernel(t_ref, p_ref, pcp_ref, biou_ref, bpcp_ref, *, ndim):
    """Fused pairwise overlap/IoU + per-target best match + pcp gather.

    t_ref:   [2*ndim, IMG_BLOCK, NT_PAD, 1]  target coords (compact; lane-broadcast
             in-kernel).
    p_ref:   [2*ndim, IMG_BLOCK, 1, NP_PAD]  prediction coords (compact;
             sublane-broadcast in-kernel).
    pcp_ref: [IMG_BLOCK, 1, NP_PAD]          prediction class probabilities.
    biou_ref: [IMG_BLOCK, NT_PAD, 1] best IoU per target (0 if nothing overlaps).
    bpcp_ref: [IMG_BLOCK, NT_PAD, 1] class proba of the first prediction achieving
              that best IoU.
    """
    nb, nt = t_ref.shape[1], t_ref.shape[2]
    npred = p_ref.shape[3]
    shape = (nb, nt, npred)

    inter = jnp.ones(shape, jnp.float32)
    t_vol = jnp.ones(shape, jnp.float32)
    p_vol = jnp.ones(shape, jnp.float32)
    ov_a = jnp.zeros(shape, jnp.bool_)   # any-over-dims: t_hi > p_lo
    ov_b = jnp.zeros(shape, jnp.bool_)   # any-over-dims: t_lo < p_hi

    for d in range(ndim):                # statically unrolled, pure VPU
        t_lo = jnp.broadcast_to(t_ref[d], shape)          # lane broadcast
        t_hi = jnp.broadcast_to(t_ref[ndim + d], shape)   # lane broadcast
        p_lo = jnp.broadcast_to(p_ref[d], shape)          # sublane broadcast
        p_hi = jnp.broadcast_to(p_ref[ndim + d], shape)   # sublane broadcast
        # NOTE: the PyTorch reference (check_overlap / calculate_iou) uses an
        # *any*-over-dims overlap test and does not clamp the per-dim
        # intersection extent; keep those semantics exactly.
        inter = inter * (jnp.minimum(t_hi, p_hi) - jnp.maximum(t_lo, p_lo) + 1.0)
        t_vol = t_vol * (t_hi - t_lo + 1.0)
        p_vol = p_vol * (p_hi - p_lo + 1.0)
        ov_a = jnp.logical_or(ov_a, t_hi > p_lo)
        ov_b = jnp.logical_or(ov_b, t_lo < p_hi)

    union = t_vol + p_vol - inter
    # Divide on the EUP (approx reciprocal); the eps clamp guards degenerate /
    # sentinel pairs — those are masked to 0 below anyway.
    iou = inter * pl.reciprocal(jnp.maximum(union, 1e-6), approx=True)
    iou_m = jnp.where(jnp.logical_and(ov_a, ov_b), iou, 0.0)

    best = jnp.max(iou_m, axis=2, keepdims=True)                     # [nb, nt, 1]
    lane = jax.lax.broadcasted_iota(jnp.int32, shape, 2)
    cand = jnp.where(iou_m == best, lane, npred)
    bidx = jnp.min(cand, axis=2, keepdims=True)                      # first argmax

    # Fused gather of the class probability at the best prediction: exactly one
    # lane equals bidx, so a masked max extracts it (no host-side gather needed).
    pcp = jnp.broadcast_to(pcp_ref[...], shape)                      # sublane bcast
    bpcp = jnp.max(jnp.where(lane == bidx, pcp, -jnp.inf),
                   axis=2, keepdims=True)

    biou_ref[...] = best
    bpcp_ref[...] = bpcp


def _pairwise_best_match(t_all, p_all, pcp_all, *, ndim):
    """t_all [d2,B,NT_PAD,1], p_all [d2,B,1,NP_PAD], pcp_all [B,1,NP_PAD]
    -> (best_iou [B,NT_PAD], best_pcp [B,NT_PAD])."""
    d2, b_pad = t_all.shape[0], t_all.shape[1]
    n_chunks = b_pad // IMG_BLOCK
    kernel = functools.partial(_iou_best_match_kernel, ndim=ndim)
    grid_spec = pltpu.PrefetchScalarGridSpec(
        num_scalar_prefetch=0,
        grid=(n_chunks,),
        in_specs=[
            pl.BlockSpec((d2, IMG_BLOCK, NT_PAD, 1), lambda c: (0, c, 0, 0)),
            pl.BlockSpec((d2, IMG_BLOCK, 1, NP_PAD), lambda c: (0, c, 0, 0)),
            pl.BlockSpec((IMG_BLOCK, 1, NP_PAD), lambda c: (c, 0, 0)),
        ],
        out_specs=[
            pl.BlockSpec((IMG_BLOCK, NT_PAD, 1), lambda c: (c, 0, 0)),
            pl.BlockSpec((IMG_BLOCK, NT_PAD, 1), lambda c: (c, 0, 0)),
        ],
    )
    best_iou, best_pcp = pl.pallas_call(
        kernel,
        out_shape=(jax.ShapeDtypeStruct((b_pad, NT_PAD, 1), jnp.float32),
                   jax.ShapeDtypeStruct((b_pad, NT_PAD, 1), jnp.float32)),
        grid_spec=grid_spec,
        compiler_params=pltpu.CompilerParams(
            dimension_semantics=("parallel",)),   # shards chunks over both TCs on v7x
    )(t_all, p_all, pcp_all)
    return best_iou[..., 0], best_pcp[..., 0]


def _masked_binary_average_precision(scores, labels, mask):
    """Binary AP (torchmetrics-style sum over (R_n - R_{n-1}) * P_n) over entries
    where mask is True; fixed shape — masked entries carry zero weight."""
    key = jnp.where(mask, scores, -jnp.inf)
    order = jnp.argsort(-key)                   # descending score; masked last
    lbl = labels[order].astype(jnp.float32)
    w = mask[order].astype(jnp.float32)
    tp = jnp.cumsum(lbl * w)
    fp = jnp.cumsum((1.0 - lbl) * w)
    precision = tp / jnp.maximum(tp + fp, 1e-12)
    n_pos = jnp.sum(lbl * w)
    recall = tp / jnp.maximum(n_pos, 1.0)
    recall_prev = jnp.concatenate([jnp.zeros((1,), jnp.float32), recall[:-1]])
    return jnp.sum((recall - recall_prev) * precision)


@functools.partial(jax.jit,
                   static_argnames=("ndim", "score_threshold", "iou_threshold"))
def _map_from_padded(tbb, tc, n_tgt, pbb, ps, pcp, *,
                     ndim, score_threshold, iou_threshold):
    """All-images, fixed-shape pipeline (no host syncs, one Pallas launch).

    tbb: [B, NT_PAD, 2*ndim]  target boxes (rows >= n_tgt[b] are sentinel boxes)
    tc:  [B, NT_PAD]          target labels (0/1)
    n_tgt: [B] int32          real target count per image
    pbb: [B, NP_PAD, 2*ndim]  prediction boxes (zero-padded)
    ps:  [B, NP_PAD]          prediction scores (padding = -inf)
    pcp: [B, NP_PAD]          prediction class probabilities
    """
    d2 = 2 * ndim
    b = tbb.shape[0]
    b_pad = ((b + IMG_BLOCK - 1) // IMG_BLOCK) * IMG_BLOCK
    pad = b_pad - b
    if pad:
        tbb = jnp.pad(tbb, ((0, pad), (0, 0), (0, 0)))
        tc = jnp.pad(tc, ((0, pad), (0, 0)))
        n_tgt = jnp.pad(n_tgt, (0, pad))
        pbb = jnp.pad(pbb, ((0, pad), (0, 0), (0, 0)))
        ps = jnp.pad(ps, ((0, pad), (0, 0)), constant_values=-jnp.inf)
        pcp = jnp.pad(pcp, ((0, pad), (0, 0)))

    # Score filtering + ascending score sort, fixed shape (valid preds first).
    # (argsort tie-breaking may differ from torch.sort on exact score ties.)
    pvalid = ps > score_threshold
    order = jnp.argsort(jnp.where(pvalid, ps, jnp.inf), axis=1)
    idx3 = jnp.broadcast_to(order[:, :, None], (b_pad, NP_PAD, d2))
    pbb_s = jnp.take_along_axis(pbb, idx3, axis=1)
    pcp_s = jnp.take_along_axis(pcp, order, axis=1)
    pvalid_s = jnp.take_along_axis(pvalid, order, axis=1)

    # Filtered-out / padded predictions become sentinel boxes that can never pass
    # the overlap test -> no mask inputs needed inside the kernel.
    sentinel = jnp.concatenate([jnp.full((ndim,), BIG, jnp.float32),
                                jnp.full((ndim,), -BIG, jnp.float32)])
    pbb_s = jnp.where(pvalid_s[:, :, None], pbb_s, sentinel)

    # Compact kernel operands (no pre-broadcast materialization in XLA):
    t_all = jnp.transpose(tbb, (2, 0, 1))[:, :, :, None]      # [d2, B, NT_PAD, 1]
    p_all = jnp.transpose(pbb_s, (2, 0, 1))[:, :, None, :]    # [d2, B, 1, NP_PAD]
    pcp_all = pcp_s[:, None, :]                                # [B, 1, NP_PAD]

    best_iou, best_pcp = _pairwise_best_match(t_all, p_all, pcp_all, ndim=ndim)

    tgt_valid = (jax.lax.broadcasted_iota(jnp.int32, (b_pad, NT_PAD), 1)
                 < n_tgt[:, None])
    hit = jnp.logical_and(best_iou > iou_threshold, tgt_valid)

    n_hit_images = jnp.sum(jnp.any(hit, axis=1).astype(jnp.int32))
    ap = _masked_binary_average_precision(best_pcp.reshape(-1), tc.reshape(-1),
                                          hit.reshape(-1))
    ap = jnp.where(n_hit_images > 0, ap, jnp.float32(jnp.nan))
    return ap, n_hit_images


class MAP:
    """JAX/Pallas port of the PyTorch mAP module (binary n_classes == 2 case)."""

    def __init__(self, ndim=3, score_threshold=0.5, iou_threshold=0.5, n_classes=2):
        self.ndim = ndim
        self.score_threshold = score_threshold
        self.iou_threshold = iou_threshold
        self.n_classes = n_classes
        self.pred_list = []
        self.target_list = []
        self.pred_keys = ["boxes", "scores", "labels"]
        self.target_keys = ["boxes", "labels"]
        self.hits = 0
        # TODO(synk): torchmetrics.AveragePrecision multiclass (n_classes > 2) path
        # is not implemented; binary AP is computed directly in JAX.

    def check_input(self, x, what):
        keys = self.pred_keys if what == "pred" else self.target_keys
        for y in x:
            if not all(k in y for k in keys):
                raise ValueError(f"{what} should have the keys {keys}")
            if len({int(y[k].shape[0]) for k in keys}) > 1:
                raise ValueError(
                    f"Inputs in {what} should have the same number of elements")

    def update(self, pred, target):
        self.check_input(pred, "pred")
        self.check_input(target, "target")
        self.pred_list.extend(pred)
        self.target_list.extend(target)

    def forward(self, pred, target):
        # Same as the PyTorch module: forward only accumulates state.
        self.update(pred, target)

    def compute(self):
        if len(self.pred_list) == 0:
            return jnp.float32(jnp.nan)
        d2 = 2 * self.ndim
        n_img = len(self.pred_list)

        # Host-side packing (one H2D transfer, no per-image device ops).
        tbb = np.empty((n_img, NT_PAD, d2), np.float32)
        tbb[:, :, :self.ndim] = BIG          # sentinel target rows
        tbb[:, :, self.ndim:] = -BIG
        tc = np.zeros((n_img, NT_PAD), np.float32)
        n_tgt = np.zeros((n_img,), np.int32)
        pbb = np.zeros((n_img, NP_PAD, d2), np.float32)
        ps = np.full((n_img, NP_PAD), -np.inf, np.float32)
        pcp = np.zeros((n_img, NP_PAD), np.float32)

        for i, (pred, target) in enumerate(zip(self.pred_list, self.target_list)):
            pb = np.asarray(pred["boxes"], dtype=np.float32)
            sc = np.asarray(pred["scores"], dtype=np.float32)
            cp = np.asarray(pred["labels"], dtype=np.float32)
            tb = np.asarray(target["boxes"], dtype=np.float32)
            tl = np.asarray(target["labels"], dtype=np.float32)
            n_p, n_t = int(pb.shape[0]), int(tb.shape[0])
            assert n_p <= NP_PAD and n_t <= NT_PAD
            pbb[i, :n_p] = pb
            ps[i, :n_p] = sc
            pcp[i, :n_p] = cp
            tbb[i, :n_t] = tb
            tc[i, :n_t] = tl
            n_tgt[i] = n_t

        ap, hits = _map_from_padded(
            jnp.asarray(tbb), jnp.asarray(tc), jnp.asarray(n_tgt),
            jnp.asarray(pbb), jnp.asarray(ps), jnp.asarray(pcp),
            ndim=self.ndim,
            score_threshold=float(self.score_threshold),
            iou_threshold=float(self.iou_threshold))
        self.hits = int(hits)   # #images with >= 1 matched target
        return ap

    def reset(self):
        self.pred_list = []
        self.target_list = []
        self.hits = 0


if __name__ == "__main__":
    key = jax.random.PRNGKey(0)
    ndim = 3
    n_pred, n_target = 12, 4

    metric = MAP(ndim=ndim, score_threshold=0.5, iou_threshold=0.5, n_classes=2)

    for _ in range(2):  # two images
        key, k1, k2, k3, k4, k5, k6 = jax.random.split(key, 7)
        lo = jax.random.uniform(k1, (n_pred, ndim), minval=0.0, maxval=20.0)
        sz = jax.random.uniform(k2, (n_pred, ndim), minval=3.0, maxval=10.0)
        pred_boxes = jnp.concatenate([lo, lo + sz], axis=1).astype(jnp.float32)
        scores = jax.random.uniform(k3, (n_pred,), minval=0.0, maxval=1.0)
        class_proba = jax.random.uniform(k4, (n_pred,), minval=0.0, maxval=1.0)

        # targets = slightly perturbed copies of the first few preds (likely hits)
        noise = jax.random.uniform(k5, (n_target, 2 * ndim), minval=-0.5, maxval=0.5)
        target_boxes = (pred_boxes[:n_target] + noise).astype(jnp.float32)
        target_labels = (jax.random.uniform(k6, (n_target,)) > 0.5).astype(jnp.int32)

        pred = {"boxes": pred_boxes, "scores": scores, "labels": class_proba}
        target = {"boxes": target_boxes, "labels": target_labels}
        # forward/update take *lists* of per-image dicts (same as the PyTorch module)
        metric.forward([pred], [target])

    result = metric.compute()
    jax.block_until_ready(result)
    print("KERNEL_OK")
</pallas_src>

<mosaic_0001>
module attributes {stable_mosaic.version = 11 : i64} {
  func.func @_iou_best_match_kernel(%arg0: i32, %arg1: memref<6x8x8x1xf32, #tpu.memory_space<vmem>>, %arg2: memref<6x8x1x128xf32, #tpu.memory_space<vmem>>, %arg3: memref<8x1x128xf32, #tpu.memory_space<vmem>>, %arg4: memref<8x8x1xf32, #tpu.memory_space<vmem>>, %arg5: memref<8x8x1xf32, #tpu.memory_space<vmem>>) attributes {dimension_semantics = [#tpu.dimension_semantics<parallel>], iteration_bounds = array<i64: 1>, scalar_prefetch = 0 : i64, scratch_operands = 0 : i64, tpu.core_type = #tpu.core_type<tc>, window_params = [{transform_indices = @transform_0, window_bounds = array<i64: 6, 8, 8, 1>}, {transform_indices = @transform_1, window_bounds = array<i64: 6, 8, 1, 128>}, {transform_indices = @transform_2, window_bounds = array<i64: 8, 1, 128>}, {transform_indices = @transform_3, window_bounds = array<i64: 8, 8, 1>}, {transform_indices = @transform_4, window_bounds = array<i64: 8, 8, 1>}]} {
    %cst = arith.constant 1.000000e+00 : f32
    %0 = vector.broadcast %cst : f32 to vector<8x8x128xf32>
    %cst_0 = arith.constant 1.000000e+00 : f32
    %1 = vector.broadcast %cst_0 : f32 to vector<8x8x128xf32>
    %cst_1 = arith.constant 1.000000e+00 : f32
    %2 = vector.broadcast %cst_1 : f32 to vector<8x8x128xf32>
    %false = arith.constant false
    %3 = vector.broadcast %false : i1 to vector<8x8x128xi1>
    %false_2 = arith.constant false
    %4 = vector.broadcast %false_2 : i1 to vector<8x8x128xi1>
    %c0 = arith.constant 0 : index
    %c0_3 = arith.constant 0 : index
    %c0_4 = arith.constant 0 : index
    %c0_5 = arith.constant 0 : index
    %5 = vector.load %arg1[%c0, %c0_3, %c0_4, %c0_5] : memref<6x8x8x1xf32, #tpu.memory_space<vmem>>, vector<1x8x8x1xf32>
    %6 = vector.shape_cast %5 : vector<1x8x8x1xf32> to vector<8x8x1xf32>
    %7 = vector.shape_cast %6 : vector<8x8x1xf32> to vector<8x8x1xf32>
    %8 = vector.broadcast %7 : vector<8x8x1xf32> to vector<8x8x128xf32>
    %c3 = arith.constant 3 : index
    %c0_6 = arith.constant 0 : index
    %c0_7 = arith.constant 0 : index
    %c0_8 = arith.constant 0 : index
    %9 = vector.load %arg1[%c3, %c0_6, %c0_7, %c0_8] : memref<6x8x8x1xf32, #tpu.memory_space<vmem>>, vector<1x8x8x1xf32>
    %10 = vector.shape_cast %9 : vector<1x8x8x1xf32> to vector<8x8x1xf32>
    %11 = vector.shape_cast %10 : vector<8x8x1xf32> to vector<8x8x1xf32>
    %12 = vector.broadcast %11 : vector<8x8x1xf32> to vector<8x8x128xf32>
    %c0_9 = arith.constant 0 : index
    %c0_10 = arith.constant 0 : index
    %c0_11 = arith.constant 0 : index
    %c0_12 = arith.constant 0 : index
    %13 = vector.load %arg2[%c0_9, %c0_10, %c0_11, %c0_12] : memref<6x8x1x128xf32, #tpu.memory_space<vmem>>, vector<1x8x1x128xf32>
    %14 = vector.shape_cast %13 : vector<1x8x1x128xf32> to vector<8x1x128xf32>
    %15 = vector.shape_cast %14 : vector<8x1x128xf32> to vector<8x1x128xf32>
    %16 = vector.broadcast %15 : vector<8x1x128xf32> to vector<8x8x128xf32>
    %c3_13 = arith.constant 3 : index
    %c0_14 = arith.constant 0 : index
    %c0_15 = arith.constant 0 : index
    %c0_16 = arith.constant 0 : index
    %17 = vector.load %arg2[%c3_13, %c0_14, %c0_15, %c0_16] : memref<6x8x1x128xf32, #tpu.memory_space<vmem>>, vector<1x8x1x128xf32>
    %18 = vector.shape_cast %17 : vector<1x8x1x128xf32> to vector<8x1x128xf32>
    %19 = vector.shape_cast %18 : vector<8x1x128xf32> to vector<8x1x128xf32>
    %20 = vector.broadcast %19 : vector<8x1x128xf32> to vector<8x8x128xf32>
    %21 = arith.minimumf %12, %20 : vector<8x8x128xf32>
    %22 = arith.maximumf %8, %16 : vector<8x8x128xf32>
    %23 = arith.subf %21, %22 : vector<8x8x128xf32>
    %cst_17 = arith.constant 1.000000e+00 : f32
    %24 = vector.broadcast %cst_17 : f32 to vector<8x8x128xf32>
    %25 = arith.addf %23, %24 : vector<8x8x128xf32>
    %26 = arith.mulf %0, %25 : vector<8x8x128xf32>
    %27 = arith.subf %12, %8 : vector<8x8x128xf32>
    %cst_18 = arith.constant 1.000000e+00 : f32
    %28 = vector.broadcast %cst_18 : f32 to vector<8x8x128xf32>
    %29 = arith.addf %27, %28 : vector<8x8x128xf32>
    %30 = arith.mulf %1, %29 : vector<8x8x128xf32>
    %31 = arith.subf %20, %16 : vector<8x8x128xf32>
    %cst_19 = arith.constant 1.000000e+00 : f32
    %32 = vector.broadcast %cst_19 : f32 to vector<8x8x128xf32>
    %33 = arith.addf %31, %32 : vector<8x8x128xf32>
    %34 = arith.mulf %2, %33 : vector<8x8x128xf32>
    %35 = arith.cmpf ogt, %12, %16 : vector<8x8x128xf32>
    %36 = arith.ori %3, %35 : vector<8x8x128xi1>
    %37 = arith.cmpf olt, %8, %20 : vector<8x8x128xf32>
    %38 = arith.ori %4, %37 : vector<8x8x128xi1>
    %c1 = arith.constant 1 : index
    %c0_20 = arith.constant 0 : index
    %c0_21 = arith.constant 0 : index
    %c0_22 = arith.constant 0 : index
    %39 = vector.load %arg1[%c1, %c0_20, %c0_21, %c0_22] : memref<6x8x8x1xf32, #tpu.memory_space<vmem>>, vector<1x8x8x1xf32>
    %40 = vector.shape_cast %39 : vector<1x8x8x1xf32> to vector<8x8x1xf32>
    %41 = vector.shape_cast %40 : vector<8x8x1xf32> to vector<8x8x1xf32>
    %42 = vector.broadcast %41 : vector<8x8x1xf32> to vector<8x8x128xf32>
    %c4 = arith.constant 4 : index
    %c0_23 = arith.constant 0 : index
    %c0_24 = arith.constant 0 : index
    %c0_25 = arith.constant 0 : index
    %43 = vector.load %arg1[%c4, %c0_23, %c0_24, %c0_25] : memref<6x8x8x1xf32, #tpu.memory_space<vmem>>, vector<1x8x8x1xf32>
    %44 = vector.shape_cast %43 : vector<1x8x8x1xf32> to vector<8x8x1xf32>
    %45 = vector.shape_cast %44 : vector<8x8x1xf32> to vector<8x8x1xf32>
    %46 = vector.broadcast %45 : vector<8x8x1xf32> to vector<8x8x128xf32>
    %c1_26 = arith.constant 1 : index
    %c0_27 = arith.constant 0 : index
    %c0_28 = arith.constant 0 : index
    %c0_29 = arith.constant 0 : index
    %47 = vector.load %arg2[%c1_26, %c0_27, %c0_28, %c0_29] : memref<6x8x1x128xf32, #tpu.memory_space<vmem>>, vector<1x8x1x128xf32>
    %48 = vector.shape_cast %47 : vector<1x8x1x128xf32> to vector<8x1x128xf32>
    %49 = vector.shape_cast %48 : vector<8x1x128xf32> to vector<8x1x128xf32>
    %50 = vector.broadcast %49 : vector<8x1x128xf32> to vector<8x8x128xf32>
    %c4_30 = arith.constant 4 : index
    %c0_31 = arith.constant 0 : index
    %c0_32 = arith.constant 0 : index
    %c0_33 = arith.constant 0 : index
    %51 = vector.load %arg2[%c4_30, %c0_31, %c0_32, %c0_33] : memref<6x8x1x128xf32, #tpu.memory_space<vmem>>, vector<1x8x1x128xf32>
    %52 = vector.shape_cast %51 : vector<1x8x1x128xf32> to vector<8x1x128xf32>
    %53 = vector.shape_cast %52 : vector<8x1x128xf32> to vector<8x1x128xf32>
    %54 = vector.broadcast %53 : vector<8x1x128xf32> to vector<8x8x128xf32>
    %55 = arith.minimumf %46, %54 : vector<8x8x128xf32>
    %56 = arith.maximumf %42, %50 : vector<8x8x128xf32>
    %57 = arith.subf %55, %56 : vector<8x8x128xf32>
    %cst_34 = arith.constant 1.000000e+00 : f32
    %58 = vector.broadcast %cst_34 : f32 to vector<8x8x128xf32>
    %59 = arith.addf %57, %58 : vector<8x8x128xf32>
    %60 = arith.mulf %26, %59 : vector<8x8x128xf32>
    %61 = arith.subf %46, %42 : vector<8x8x128xf32>
    %cst_35 = arith.constant 1.000000e+00 : f32
    %62 = vector.broadcast %cst_35 : f32 to vector<8x8x128xf32>
    %63 = arith.addf %61, %62 : vector<8x8x128xf32>
    %64 = arith.mulf %30, %63 : vector<8x8x128xf32>
    %65 = arith.subf %54, %50 : vector<8x8x128xf32>
    %cst_36 = arith.constant 1.000000e+00 : f32
    %66 = vector.broadcast %cst_36 : f32 to vector<8x8x128xf32>
    %67 = arith.addf %65, %66 : vector<8x8x128xf32>
    %68 = arith.mulf %34, %67 : vector<8x8x128xf32>
    %69 = arith.cmpf ogt, %46, %50 : vector<8x8x128xf32>
    %70 = arith.ori %36, %69 : vector<8x8x128xi1>
    %71 = arith.cmpf olt, %42, %54 : vector<8x8x128xf32>
    %72 = arith.ori %38, %71 : vector<8x8x128xi1>
    %c2 = arith.constant 2 : index
    %c0_37 = arith.constant 0 : index
    %c0_38 = arith.constant 0 : index
    %c0_39 = arith.constant 0 : index
    %73 = vector.load %arg1[%c2, %c0_37, %c0_38, %c0_39] : memref<6x8x8x1xf32, #tpu.memory_space<vmem>>, vector<1x8x8x1xf32>
    %74 = vector.shape_cast %73 : vector<1x8x8x1xf32> to vector<8x8x1xf32>
    %75 = vector.shape_cast %74 : vector<8x8x1xf32> to vector<8x8x1xf32>
    %76 = vector.broadcast %75 : vector<8x8x1xf32> to vector<8x8x128xf32>
    %c5 = arith.constant 5 : index
    %c0_40 = arith.constant 0 : index
    %c0_41 = arith.constant 0 : index
    %c0_42 = arith.constant 0 : index
    %77 = vector.load %arg1[%c5, %c0_40, %c0_41, %c0_42] : memref<6x8x8x1xf32, #tpu.memory_space<vmem>>, vector<1x8x8x1xf32>
    %78 = vector.shape_cast %77 : vector<1x8x8x1xf32> to vector<8x8x1xf32>
    %79 = vector.shape_cast %78 : vector<8x8x1xf32> to vector<8x8x1xf32>
    %80 = vector.broadcast %79 : vector<8x8x1xf32> to vector<8x8x128xf32>
    %c2_43 = arith.constant 2 : index
    %c0_44 = arith.constant 0 : index
    %c0_45 = arith.constant 0 : index
    %c0_46 = arith.constant 0 : index
    %81 = vector.load %arg2[%c2_43, %c0_44, %c0_45, %c0_46] : memref<6x8x1x128xf32, #tpu.memory_space<vmem>>, vector<1x8x1x128xf32>
    %82 = vector.shape_cast %81 : vector<1x8x1x128xf32> to vector<8x1x128xf32>
    %83 = vector.shape_cast %82 : vector<8x1x128xf32> to vector<8x1x128xf32>
    %84 = vector.broadcast %83 : vector<8x1x128xf32> to vector<8x8x128xf32>
    %c5_47 = arith.constant 5 : index
    %c0_48 = arith.constant 0 : index
    %c0_49 = arith.constant 0 : index
    %c0_50 = arith.constant 0 : index
    %85 = vector.load %arg2[%c5_47, %c0_48, %c0_49, %c0_50] : memref<6x8x1x128xf32, #tpu.memory_space<vmem>>, vector<1x8x1x128xf32>
    %86 = vector.shape_cast %85 : vector<1x8x1x128xf32> to vector<8x1x128xf32>
    %87 = vector.shape_cast %86 : vector<8x1x128xf32> to vector<8x1x128xf32>
    %88 = vector.broadcast %87 : vector<8x1x128xf32> to vector<8x8x128xf32>
    %89 = arith.minimumf %80, %88 : vector<8x8x128xf32>
    %90 = arith.maximumf %76, %84 : vector<8x8x128xf32>
    %91 = arith.subf %89, %90 : vector<8x8x128xf32>
    %cst_51 = arith.constant 1.000000e+00 : f32
    %92 = vector.broadcast %cst_51 : f32 to vector<8x8x128xf32>
    %93 = arith.addf %91, %92 : vector<8x8x128xf32>
    %94 = arith.mulf %60, %93 : vector<8x8x128xf32>
    %95 = arith.subf %80, %76 : vector<8x8x128xf32>
    %cst_52 = arith.constant 1.000000e+00 : f32
    %96 = vector.broadcast %cst_52 : f32 to vector<8x8x128xf32>
    %97 = arith.addf %95, %96 : vector<8x8x128xf32>
    %98 = arith.mulf %64, %97 : vector<8x8x128xf32>
    %99 = arith.subf %88, %84 : vector<8x8x128xf32>
    %cst_53 = arith.constant 1.000000e+00 : f32
    %100 = vector.broadcast %cst_53 : f32 to vector<8x8x128xf32>
    %101 = arith.addf %99, %100 : vector<8x8x128xf32>
    %102 = arith.mulf %68, %101 : vector<8x8x128xf32>
    %103 = arith.cmpf ogt, %80, %84 : vector<8x8x128xf32>
    %104 = arith.ori %70, %103 : vector<8x8x128xi1>
    %105 = arith.cmpf olt, %76, %88 : vector<8x8x128xf32>
    %106 = arith.ori %72, %105 : vector<8x8x128xi1>
    %107 = arith.addf %98, %102 : vector<8x8x128xf32>
    %108 = arith.subf %107, %94 : vector<8x8x128xf32>
    %cst_54 = arith.constant 9.99999997E-7 : f32
    %109 = vector.broadcast %cst_54 : f32 to vector<8x8x128xf32>
    %110 = arith.maximumf %108, %109 : vector<8x8x128xf32>
    %111 = tpu.reciprocal %110 {approx = true} : vector<8x8x128xf32> -> vector<8x8x128xf32>
    %112 = arith.mulf %94, %111 : vector<8x8x128xf32>
    %113 = arith.andi %104, %106 : vector<8x8x128xi1>
    %cst_55 = arith.constant 0.000000e+00 : f32
    %114 = vector.broadcast %cst_55 : f32 to vector<8x8x128xf32>
    %115 = arith.select %113, %112, %114 : vector<8x8x128xi1>, vector<8x8x128xf32>
    %cst_56 = arith.constant dense<0xFF800000> : vector<8x8xf32>
    %116 = vector.multi_reduction <maximumf>, %115, %cst_56 [2] : vector<8x8x128xf32> to vector<8x8xf32>
    %117 = vector.shape_cast %116 : vector<8x8xf32> to vector<8x8x1xf32>
    %118 = tpu.iota {dimensions = array<i32: 2>} : vector<8x8x128xi32>
    %119 = vector.broadcast %117 : vector<8x8x1xf32> to vector<8x8x128xf32>
    %120 = arith.cmpf oeq, %115, %119 : vector<8x8x128xf32>
    %c128_i32 = arith.constant 128 : i32
    %121 = vector.broadcast %c128_i32 : i32 to vector<8x8x128xi32>
    %122 = arith.select %120, %118, %121 : vector<8x8x128xi1>, vector<8x8x128xi32>
    %cst_57 = arith.constant dense<2147483647> : vector<8x8xi32>
    %123 = vector.multi_reduction <minsi>, %122, %cst_57 [2] : vector<8x8x128xi32> to vector<8x8xi32>
    %124 = vector.shape_cast %123 : vector<8x8xi32> to vector<8x8x1xi32>
    %c0_58 = arith.constant 0 : index
    %c0_59 = arith.constant 0 : index
    %c0_60 = arith.constant 0 : index
    %125 = vector.load %arg3[%c0_58, %c0_59, %c0_60] : memref<8x1x128xf32, #tpu.memory_space<vmem>>, vector<8x1x128xf32>
    %126 = vector.shape_cast %125 : vector<8x1x128xf32> to vector<8x1x128xf32>
    %127 = vector.broadcast %126 : vector<8x1x128xf32> to vector<8x8x128xf32>
    %128 = vector.broadcast %124 : vector<8x8x1xi32> to vector<8x8x128xi32>
    %129 = arith.cmpi eq, %118, %128 : vector<8x8x128xi32>
    %cst_61 = arith.constant 0xFF800000 : f32
    %130 = vector.broadcast %cst_61 : f32 to vector<8x8x128xf32>
    %131 = arith.select %129, %127, %130 : vector<8x8x128xi1>, vector<8x8x128xf32>
    %cst_62 = arith.constant dense<0xFF800000> : vector<8x8xf32>
    %132 = vector.multi_reduction <maximumf>, %131, %cst_62 [2] : vector<8x8x128xf32> to vector<8x8xf32>
    %133 = vector.shape_cast %132 : vector<8x8xf32> to vector<8x8x1xf32>
    %c0_63 = arith.constant 0 : index
    %c0_64 = arith.constant 0 : index
    %c0_65 = arith.constant 0 : index
    %134 = vector.load %arg4[%c0_63, %c0_64, %c0_65] : memref<8x8x1xf32, #tpu.memory_space<vmem>>, vector<8x8x1xf32>
    tpu.vector_store %arg4[%c0_63, %c0_64, %c0_65], %117 {strides = array<i32>} : memref<8x8x1xf32, #tpu.memory_space<vmem>>, vector<8x8x1xf32>,
    %c0_66 = arith.constant 0 : index
    %c0_67 = arith.constant 0 : index
    %c0_68 = arith.constant 0 : index
    %135 = vector.load %arg5[%c0_66, %c0_67, %c0_68] : memref<8x8x1xf32, #tpu.memory_space<vmem>>, vector<8x8x1xf32>
    tpu.vector_store %arg5[%c0_66, %c0_67, %c0_68], %133 {strides = array<i32>} : memref<8x8x1xf32, #tpu.memory_space<vmem>>, vector<8x8x1xf32>,
    return
  }
  func.func @transform_0(%arg0: i32) -> (i32, i32, i32, i32) {
    %c0_i32 = arith.constant 0 : i32
    %c0_i32_0 = arith.constant 0 : i32
    %c0_i32_1 = arith.constant 0 : i32
    %c0_i32_2 = arith.constant 0 : i32
    return %c0_i32, %arg0, %c0_i32_0, %c0_i32_1 : i32, i32, i32, i32
  }
  func.func @transform_1(%arg0: i32) -> (i32, i32, i32, i32) {
    %c0_i32 = arith.constant 0 : i32
    %c0_i32_0 = arith.constant 0 : i32
    %c0_i32_1 = arith.constant 0 : i32
    %c0_i32_2 = arith.constant 0 : i32
    return %c0_i32, %arg0, %c0_i32_0, %c0_i32_1 : i32, i32, i32, i32
  }
  func.func @transform_2(%arg0: i32) -> (i32, i32, i32) {
    %c0_i32 = arith.constant 0 : i32
    %c0_i32_0 = arith.constant 0 : i32
    %c0_i32_1 = arith.constant 0 : i32
    return %arg0, %c0_i32, %c0_i32_0 : i32, i32, i32
  }
  func.func @transform_3(%arg0: i32) -> (i32, i32, i32) {
    %c0_i32 = arith.constant 0 : i32
    %c0_i32_0 = arith.constant 0 : i32
    %c0_i32_1 = arith.constant 0 : i32
    return %arg0, %c0_i32, %c0_i32_0 : i32, i32, i32
  }
  func.func @transform_4(%arg0: i32) -> (i32, i32, i32) {
    %c0_i32 = arith.constant 0 : i32
    %c0_i32_0 = arith.constant 0 : i32
    %c0_i32_1 = arith.constant 0 : i32
    return %arg0, %c0_i32, %c0_i32_0 : i32, i32, i32
  }
}

</mosaic_0001>

<llo_original>
// kernel: squeeze.3
$region0: #{squeeze.3}
  %s0 = inlined_call_operand.vmem [shape: f32[8,8], index: 0, kind: input, shape index: {}]
  %s1 = inlined_call_operand.vmem [shape: f32[64], index: 1, kind: output, shape index: {}]
  $region1: #{squeeze.3} parent=0
    #allocation0 [shape = 'u8[4096]{0}', space=vmem, size = 0x1000, scoped, tag = 'scoped mem for output reshape']
    %v2 = vld [vmem:[%s0] sm:$0x1]
    %vm3 = vcmask 64512
    %4 = vst.msk [vmem:[#allocation0] sm:$0x1] %vm3, %v2
    %s5 = scalar_lea.vmem %s0, 7
    %v6 = vld [vmem:[%s5] sm:$0x1]
    %7 = vrot.lane.b32.xlu0 %v6, 56
    %v8 = vpop.permute.xlu0 %7
    %vm9 = vcmask 523712
    %10 = vst.msk [vmem:[#allocation0] sm:$0x1] %vm9, %v8
    %s11 = scalar_lea.vmem %s0, 6
    %v12 = vld [vmem:[%s11] sm:$0x1]
    %13 = vrot.lane.b32.xlu0 %v12, 48
    %v14 = vpop.permute.xlu0 %13
    %vm15 = vcmask 458112
    %16 = vst.msk [vmem:[#allocation0] sm:$0x1] %vm15, %v14
    %s17 = scalar_lea.vmem %s0, 5
    %v18 = vld [vmem:[%s17] sm:$0x1]
    %19 = vrot.lane.b32.xlu0 %v18, 40
    %v20 = vpop.permute.xlu0 %19
    %vm21 = vcmask 392512
    %22 = vst.msk [vmem:[#allocation0] sm:$0x1] %vm21, %v20
    %s23 = scalar_lea.vmem %s0, 4
    %v24 = vld [vmem:[%s23] sm:$0x1]
    %25 = vrot.lane.b32.xlu0 %v24, 32
    %v26 = vpop.permute.xlu0 %25
    %vm27 = vcmask 326912
    %28 = vst.msk [vmem:[#allocation0] sm:$0x1] %vm27, %v26
    %s29 = scalar_lea.vmem %s0, 3
    %v30 = vld [vmem:[%s29] sm:$0x1]
    %31 = vrot.lane.b32.xlu0 %v30, 24
    %v32 = vpop.permute.xlu0 %31
    %vm33 = vcmask 261312
    %34 = vst.msk [vmem:[#allocation0] sm:$0x1] %vm33, %v32
    %s35 = scalar_lea.vmem %s0, 2
    %v36 = vld [vmem:[%s35] sm:$0x1]
    %37 = vrot.lane.b32.xlu0 %v36, 16
    %v38 = vpop.permute.xlu0 %37
    %vm39 = vcmask 195712
    %40 = vst.msk [vmem:[#allocation0] sm:$0x1] %vm39, %v38
    %s41 = scalar_lea.vmem %s0, 1
    %v42 = vld [vmem:[%s41] sm:$0x1]
    %43 = vrot.lane.b32.xlu0 %v42, 8
    %v44 = vpop.permute.xlu0 %43
    %vm45 = vcmask 130112
    %46 = vst.msk [vmem:[#allocation0] sm:$0x1] %vm45, %v44
    %s48 = sshll.u32 1, 1
    %s49 = ssub.s32 %s48, 1
    %v51 = vld [vmem:[#allocation0] sm:%s49]
    %s52 = sshll.u32 1, 1
    %s53 = ssub.s32 %s52, 1
    %54 = vst [vmem:[%s1] sm:%s53] %v51

// kernel: _map_from_padded.1
$region0: #{_map_from_padded.1}
  #allocation0 [shape = 'u32[]', space=smem, size = 0x4, offset = 0x4, fixed_abs, tag = 'smem constant byte address 0x4 - core index']
  #allocation1 [shape = 'u32[144,128]{1,0:T(1,128)}', space=vmem, size = 0x12000, scoped, tag = 'internal scratch']
  %s0 = inlined_call_operand.vmem [shape: f32[6,8,8,1], index: 0, kind: input, shape index: {}]
  %s1 = inlined_call_operand.vmem [shape: f32[6,8,1,128], index: 1, kind: input, shape index: {}]
  %s2 = inlined_call_operand.vmem [shape: f32[8,1,128], index: 2, kind: input, shape index: {}]
  %s3 = inlined_call_operand.vmem [shape: f32[8,8,1], index: 3, kind: output, shape index: {0}]
  %s4 = inlined_call_operand.vmem [shape: f32[8,8,1], index: 4, kind: output, shape index: {1}]
  %5 = xla_tuple %s3, %s4
  %s6 = sld [smem:[#allocation0]]
  $region30: #{_map_from_padded.1} parent=0
    _
  %s8 = ssub.s32 1, %s6
  %s9 = scalar_select 0, %s8, %s6
  // Predicated region
  $region2: #{_map_from_padded.1} parent=0 // pred_check
    _
  $region3: #{_map_from_padded.1} parent=0 // pred_check_branch
    %11 = sbr.rel (0) target = $region5
  $region4: #{_map_from_padded.1} parent=0 // pred_region
    _
  $region5: #{_map_from_padded.1} parent=0 // pred_fallthru
    _
  // Predicated region
  $region6: #{_map_from_padded.1} parent=0 // pred_check
    _
  $region7: #{_map_from_padded.1} parent=0 // pred_check_branch
    %13 = sbr.rel (0) target = $region9
  $region8: #{_map_from_padded.1} parent=0 // pred_region
    _
  $region9: #{_map_from_padded.1} parent=0 // pred_fallthru
    _
  // Predicated region
  $region10: #{_map_from_padded.1} parent=0 // pred_check
    _
  $region11: #{_map_from_padded.1} parent=0 // pred_check_branch
    %15 = sbr.rel (0) target = $region13
  $region12: #{_map_from_padded.1} parent=0 // pred_region
    _
  $region13: #{_map_from_padded.1} parent=0 // pred_fallthru
    _
  %v16 = vld [vmem:[%s0] sm:$0xff]
  %v17 = vld [vmem:[%s0 + $0x8] sm:$0xff]
  %v18 = vld [vmem:[%s0 + $0x10] sm:$0xff]
  %v19 = vld [vmem:[%s0 + $0x18] sm:$0xff]
  %v20 = vld [vmem:[%s0 + $0x20] sm:$0xff]
  %v21 = vld [vmem:[%s0 + $0x28] sm:$0xff]
  %v22 = vld [vmem:[%s0 + $0x30] sm:$0xff]
  %v23 = vld [vmem:[%s0 + $0x38] sm:$0xff]
  %25 = vset.pattern.permute.xlu0 0
  %26 = vperm.xlu0 %25, %v16
  %v27 = vpop.permute.xlu0 %26
  %30 = vset.pattern.permute.xlu0 0
  %31 = vperm.xlu0 %30, %v17
  %v32 = vpop.permute.xlu0 %31
  %35 = vset.pattern.permute.xlu0 0
  %36 = vperm.xlu0 %35, %v18
  %v37 = vpop.permute.xlu0 %36
  %40 = vset.pattern.permute.xlu0 0
  %41 = vperm.xlu0 %40, %v19
  %v42 = vpop.permute.xlu0 %41
  %45 = vset.pattern.permute.xlu0 0
  %46 = vperm.xlu0 %45, %v20
  %v47 = vpop.permute.xlu0 %46
  %50 = vset.pattern.permute.xlu0 0
  %51 = vperm.xlu0 %50, %v21
  %v52 = vpop.permute.xlu0 %51
  %55 = vset.pattern.permute.xlu0 0
  %56 = vperm.xlu0 %55, %v22
  %v57 = vpop.permute.xlu0 %56
  %60 = vset.pattern.permute.xlu0 0
  %61 = vperm.xlu0 %60, %v23
  %v62 = vpop.permute.xlu0 %61
  %s64 = scalar_lea.vmem %s0, 192
  %v65 = vld [vmem:[%s64] sm:$0xff]
  %v66 = vld [vmem:[%s64 + $0x8] sm:$0xff]
  %v67 = vld [vmem:[%s64 + $0x10] sm:$0xff]
  %v68 = vld [vmem:[%s64 + $0x18] sm:$0xff]
  %v69 = vld [vmem:[%s64 + $0x20] sm:$0xff]
  %v70 = vld [vmem:[%s64 + $0x28] sm:$0xff]
  %v71 = vld [vmem:[%s64 + $0x30] sm:$0xff]
  %v72 = vld [vmem:[%s64 + $0x38] sm:$0xff]
  %74 = vset.pattern.permute.xlu0 0
  %75 = vperm.xlu0 %74, %v65
  %v76 = vpop.permute.xlu0 %75
  %79 = vset.pattern.permute.xlu0 0
  %80 = vperm.xlu0 %79, %v66
  %v81 = vpop.permute.xlu0 %80
  %84 = vset.pattern.permute.xlu0 0
  %85 = vperm.xlu0 %84, %v67
  %v86 = vpop.permute.xlu0 %85
  %89 = vset.pattern.permute.xlu0 0
  %90 = vperm.xlu0 %89, %v68
  %v91 = vpop.permute.xlu0 %90
  %94 = vset.pattern.permute.xlu0 0
  %95 = vperm.xlu0 %94, %v69
  %v96 = vpop.permute.xlu0 %95
  %99 = vset.pattern.permute.xlu0 0
  %100 = vperm.xlu0 %99, %v70
  %v101 = vpop.permute.xlu0 %100
  %104 = vset.pattern.permute.xlu0 0
  %105 = vperm.xlu0 %104, %v71
  %v106 = vpop.permute.xlu0 %105
  %109 = vset.pattern.permute.xlu0 0
  %110 = vperm.xlu0 %109, %v72
  %v111 = vpop.permute.xlu0 %110
  %v113 = vld [vmem:[%s1] sm:$0x1]
  %v114 = vld [vmem:[%s1 + $0x1] sm:$0x1]
  %v115 = vld [vmem:[%s1 + $0x2] sm:$0x1]
  %v116 = vld [vmem:[%s1 + $0x3] sm:$0x1]
  %v117 = vld [vmem:[%s1 + $0x4] sm:$0x1]
  %v118 = vld [vmem:[%s1 + $0x5] sm:$0x1]
  %v119 = vld [vmem:[%s1 + $0x6] sm:$0x1]
  %v120 = vld [vmem:[%s1 + $0x7] sm:$0x1]
  %v129 = vlaneseq
  %v130 = vshrl.u32 %v129, 7
  %v131 = vsub.s32 0, %v130
  %v132 = vrot.slane %v113, %v131
  %v133 = vlaneseq
  %v134 = vshrl.u32 %v133, 7
  %v135 = vsub.s32 0, %v134
  %v136 = vrot.slane %v114, %v135
  %v137 = vlaneseq
  %v138 = vshrl.u32 %v137, 7
  %v139 = vsub.s32 0, %v138
  %v140 = vrot.slane %v115, %v139
  %v141 = vlaneseq
  %v142 = vshrl.u32 %v141, 7
  %v143 = vsub.s32 0, %v142
  %v144 = vrot.slane %v116, %v143
  %v145 = vlaneseq
  %v146 = vshrl.u32 %v145, 7
  %v147 = vsub.s32 0, %v146
  %v148 = vrot.slane %v117, %v147
  %v149 = vlaneseq
  %v150 = vshrl.u32 %v149, 7
  %v151 = vsub.s32 0, %v150
  %v152 = vrot.slane %v118, %v151
  %v153 = vlaneseq
  %v154 = vshrl.u32 %v153, 7
  %v155 = vsub.s32 0, %v154
  %v156 = vrot.slane %v119, %v155
  %v157 = vlaneseq
  %v158 = vshrl.u32 %v157, 7
  %v159 = vsub.s32 0, %v158
  %v160 = vrot.slane %v120, %v159
  %s169 = scalar_lea.vmem %s1, 24
  %v170 = vld [vmem:[%s169] sm:$0x1]
  %v171 = vld [vmem:[%s169 + $0x1] sm:$0x1]
  %v172 = vld [vmem:[%s169 + $0x2] sm:$0x1]
  %v173 = vld [vmem:[%s169 + $0x3] sm:$0x1]
  %v174 = vld [vmem:[%s169 + $0x4] sm:$0x1]
  %v175 = vld [vmem:[%s169 + $0x5] sm:$0x1]
  %v176 = vld [vmem:[%s169 + $0x6] sm:$0x1]
  %v177 = vld [vmem:[%s169 + $0x7] sm:$0x1]
  %v186 = vlaneseq
  %v187 = vshrl.u32 %v186, 7
  %v188 = vsub.s32 0, %v187
  %v189 = vrot.slane %v170, %v188
  %v190 = vlaneseq
  %v191 = vshrl.u32 %v190, 7
  %v192 = vsub.s32 0, %v191
  %v193 = vrot.slane %v171, %v192
  %v194 = vlaneseq
  %v195 = vshrl.u32 %v194, 7
  %v196 = vsub.s32 0, %v195
  %v197 = vrot.slane %v172, %v196
  %v198 = vlaneseq
  %v199 = vshrl.u32 %v198, 7
  %v200 = vsub.s32 0, %v199
  %v201 = vrot.slane %v173, %v200
  %v202 = vlaneseq
  %v203 = vshrl.u32 %v202, 7
  %v204 = vsub.s32 0, %v203
  %v205 = vrot.slane %v174, %v204
  %v206 = vlaneseq
  %v207 = vshrl.u32 %v206, 7
  %v208 = vsub.s32 0, %v207
  %v209 = vrot.slane %v175, %v208
  %v210 = vlaneseq
  %v211 = vshrl.u32 %v210, 7
  %v212 = vsub.s32 0, %v211
  %v213 = vrot.slane %v176, %v212
  %v214 = vlaneseq
  %v215 = vshrl.u32 %v214, 7
  %v216 = vsub.s32 0, %v215
  %v217 = vrot.slane %v177, %v216
  %v226 = vmin.f32 %v76, %v189
  %v227 = vmin.f32 %v81, %v193
  %v228 = vmin.f32 %v86, %v197
  %v229 = vmin.f32 %v91, %v201
  %v230 = vmin.f32 %v96, %v205
  %v231 = vmin.f32 %v101, %v209
  %v232 = vmin.f32 %v106, %v213
  %v233 = vmin.f32 %v111, %v217
  %v234 = vmax.f32 %v27, %v132
  %v235 = vmax.f32 %v32, %v136
  %v236 = vmax.f32 %v37, %v140
  %v237 = vmax.f32 %v42, %v144
  %v238 = vmax.f32 %v47, %v148
  %v239 = vmax.f32 %v52, %v152
  %v240 = vmax.f32 %v57, %v156
  %v241 = vmax.f32 %v62, %v160
  %v242 = vsub.f32 %v226, %v234
  %v243 = vsub.f32 %v227, %v235
  %v244 = vsub.f32 %v228, %v236
  %v245 = vsub.f32 %v229, %v237
  %v246 = vsub.f32 %v230, %v238
  %v247 = vsub.f32 %v231, %v239
  %v248 = vsub.f32 %v232, %v240
  %v249 = vsub.f32 %v233, %v241
  %v250 = vadd.f32 %v242, 1.0
  %v251 = vadd.f32 %v243, 1.0
  %v252 = vadd.f32 %v244, 1.0
  %v253 = vadd.f32 %v245, 1.0
  %v254 = vadd.f32 %v246, 1.0
  %v255 = vadd.f32 %v247, 1.0
  %v256 = vadd.f32 %v248, 1.0
  %v257 = vadd.f32 %v249, 1.0
  %v258 = vsub.f32 %v76, %v27
  %v259 = vsub.f32 %v81, %v32
  %v260 = vsub.f32 %v86, %v37
  %v261 = vsub.f32 %v91, %v42
  %v262 = vsub.f32 %v96, %v47
  %v263 = vsub.f32 %v101, %v52
  %v264 = vsub.f32 %v106, %v57
  %v265 = vsub.f32 %v111, %v62
  %v266 = vadd.f32 %v258, 1.0
  %v267 = vadd.f32 %v259, 1.0
  %v268 = vadd.f32 %v260, 1.0
  %v269 = vadd.f32 %v261, 1.0
  %v270 = vadd.f32 %v262, 1.0
  %v271 = vadd.f32 %v263, 1.0
  %v272 = vadd.f32 %v264, 1.0
  %v273 = vadd.f32 %v265, 1.0
  %v274 = vsub.f32 %v189, %v132
  %v275 = vsub.f32 %v193, %v136
  %v276 = vsub.f32 %v197, %v140
  %v277 = vsub.f32 %v201, %v144
  %v278 = vsub.f32 %v205, %v148
  %v279 = vsub.f32 %v209, %v152
  %v280 = vsub.f32 %v213, %v156
  %v281 = vsub.f32 %v217, %v160
  %v282 = vadd.f32 %v274, 1.0
  %v283 = vadd.f32 %v275, 1.0
  %v284 = vadd.f32 %v276, 1.0
  %v285 = vadd.f32 %v277, 1.0
  %v286 = vadd.f32 %v278, 1.0
  %v287 = vadd.f32 %v279, 1.0
  %v288 = vadd.f32 %v280, 1.0
  %v289 = vadd.f32 %v281, 1.0
  %vm290 = vcmp.gt.f32.partialorder %v76, %v132
  %vm291 = vcmp.gt.f32.partialorder %v81, %v136
  %vm292 = vcmp.gt.f32.partialorder %v86, %v140
  %vm293 = vcmp.gt.f32.partialorder %v91, %v144
  %vm294 = vcmp.gt.f32.partialorder %v96, %v148
  %vm295 = vcmp.gt.f32.partialorder %v101, %v152
  %vm296 = vcmp.gt.f32.partialorder %v106, %v156
  %vm297 = vcmp.gt.f32.partialorder %v111, %v160
  %vm298 = vcmp.lt.f32.partialorder %v27, %v189
  %vm299 = vcmp.lt.f32.partialorder %v32, %v193
  %vm300 = vcmp.lt.f32.partialorder %v37, %v197
  %vm301 = vcmp.lt.f32.partialorder %v42, %v201
  %vm302 = vcmp.lt.f32.partialorder %v47, %v205
  %vm303 = vcmp.lt.f32.partialorder %v52, %v209
  %vm304 = vcmp.lt.f32.partialorder %v57, %v213
  %vm305 = vcmp.lt.f32.partialorder %v62, %v217
  %s306 = scalar_lea.vmem %s0, 64
  %v307 = vld [vmem:[%s306] sm:$0xff]
  %v308 = vld [vmem:[%s306 + $0x8] sm:$0xff]
  %v309 = vld [vmem:[%s306 + $0x10] sm:$0xff]
  %v310 = vld [vmem:[%s306 + $0x18] sm:$0xff]
  %v311 = vld [vmem:[%s306 + $0x20] sm:$0xff]
  %v312 = vld [vmem:[%s306 + $0x28] sm:$0xff]
  %v313 = vld [vmem:[%s306 + $0x30] sm:$0xff]
  %v314 = vld [vmem:[%s306 + $0x38] sm:$0xff]
  %316 = vset.pattern.permute.xlu0 0
  %317 = vperm.xlu0 %316, %v307
  %v318 = vpop.permute.xlu0 %317
  %321 = vset.pattern.permute.xlu0 0
  %322 = vperm.xlu0 %321, %v308
  %v323 = vpop.permute.xlu0 %322
  %326 = vset.pattern.permute.xlu0 0
  %327 = vperm.xlu0 %326, %v309
  %v328 = vpop.permute.xlu0 %327
  %331 = vset.pattern.permute.xlu0 0
  %332 = vperm.xlu0 %331, %v310
  %v333 = vpop.permute.xlu0 %332
  %336 = vset.pattern.permute.xlu0 0
  %337 = vperm.xlu0 %336, %v311
  %v338 = vpop.permute.xlu0 %337
  %341 = vset.pattern.permute.xlu0 0
  %342 = vperm.xlu0 %341, %v312
  %v343 = vpop.permute.xlu0 %342
  %346 = vset.pattern.permute.xlu0 0
  %347 = vperm.xlu0 %346, %v313
  %v348 = vpop.permute.xlu0 %347
  %351 = vset.pattern.permute.xlu0 0
  %352 = vperm.xlu0 %351, %v314
  %v353 = vpop.permute.xlu0 %352
  %s355 = scalar_lea.vmem %s0, 256
  %v356 = vld [vmem:[%s355] sm:$0xff]
  %v357 = vld [vmem:[%s355 + $0x8] sm:$0xff]
  %v358 = vld [vmem:[%s355 + $0x10] sm:$0xff]
  %v359 = vld [vmem:[%s355 + $0x18] sm:$0xff]
  %v360 = vld [vmem:[%s355 + $0x20] sm:$0xff]
  %v361 = vld [vmem:[%s355 + $0x28] sm:$0xff]
  %v362 = vld [vmem:[%s355 + $0x30] sm:$0xff]
  %v363 = vld [vmem:[%s355 + $0x38] sm:$0xff]
  %365 = vset.pattern.permute.xlu0 0
  %366 = vperm.xlu0 %365, %v356
  %v367 = vpop.permute.xlu0 %366
  %370 = vset.pattern.permute.xlu0 0
  %371 = vperm.xlu0 %370, %v357
  %v372 = vpop.permute.xlu0 %371
  %375 = vset.pattern.permute.xlu0 0
  %376 = vperm.xlu0 %375, %v358
  %v377 = vpop.permute.xlu0 %376
  %380 = vset.pattern.permute.xlu0 0
  %381 = vperm.xlu0 %380, %v359
  %v382 = vpop.permute.xlu0 %381
  %385 = vset.pattern.permute.xlu0 0
  %386 = vperm.xlu0 %385, %v360
  %v387 = vpop.permute.xlu0 %386
  %390 = vset.pattern.permute.xlu0 0
  %391 = vperm.xlu0 %390, %v361
  %v392 = vpop.permute.xlu0 %391
  %395 = vset.pattern.permute.xlu0 0
  %396 = vperm.xlu0 %395, %v362
  %v397 = vpop.permute.xlu0 %396
  %400 = vset.pattern.permute.xlu0 0
  %401 = vperm.xlu0 %400, %v363
  %v402 = vpop.permute.xlu0 %401
  %s404 = scalar_lea.vmem %s1, 8
  %v405 = vld [vmem:[%s404] sm:$0x1]
  %v406 = vld [vmem:[%s404 + $0x1] sm:$0x1]
  %v407 = vld [vmem:[%s404 + $0x2] sm:$0x1]
  %v408 = vld [vmem:[%s404 + $0x3] sm:$0x1]
  %v409 = vld [vmem:[%s404 + $0x4] sm:$0x1]
  %v410 = vld [vmem:[%s404 + $0x5] sm:$0x1]
  %v411 = vld [vmem:[%s404 + $0x6] sm:$0x1]
  %v412 = vld [vmem:[%s404 + $0x7] sm:$0x1]
  %v421 = vlaneseq
  %v422 = vshrl.u32 %v421, 7
  %v423 = vsub.s32 0, %v422
  %v424 = vrot.slane %v405, %v423
  %v425 = vlaneseq
  %v426 = vshrl.u32 %v425, 7
  %v427 = vsub.s32 0, %v426
  %v428 = vrot.slane %v406, %v427
  %v429 = vlaneseq
  %v430 = vshrl.u32 %v429, 7
  %v431 = vsub.s32 0, %v430
  %v432 = vrot.slane %v407, %v431
  %v433 = vlaneseq
  %v434 = vshrl.u32 %v433, 7
  %v435 = vsub.s32 0, %v434
  %v436 = vrot.slane %v408, %v435
  %v437 = vlaneseq
  %v438 = vshrl.u32 %v437, 7
  %v439 = vsub.s32 0, %v438
  %v440 = vrot.slane %v409, %v439
  %v441 = vlaneseq
  %v442 = vshrl.u32 %v441, 7
  %v443 = vsub.s32 0, %v442
  %v444 = vrot.slane %v410, %v443
  %v445 = vlaneseq
  %v446 = vshrl.u32 %v445, 7
  %v447 = vsub.s32 0, %v446
  %v448 = vrot.slane %v411, %v447
  %v449 = vlaneseq
  %v450 = vshrl.u32 %v449, 7
  %v451 = vsub.s32 0, %v450
  %v452 = vrot.slane %v412, %v451
  %s461 = scalar_lea.vmem %s1, 32
  %v462 = vld [vmem:[%s461] sm:$0x1]
  %v463 = vld [vmem:[%s461 + $0x1] sm:$0x1]
  %v464 = vld [vmem:[%s461 + $0x2] sm:$0x1]
  %v465 = vld [vmem:[%s461 + $0x3] sm:$0x1]
  %v466 = vld [vmem:[%s461 + $0x4] sm:$0x1]
  %v467 = vld [vmem:[%s461 + $0x5] sm:$0x1]
  %v468 = vld [vmem:[%s461 + $0x6] sm:$0x1]
  %v469 = vld [vmem:[%s461 + $0x7] sm:$0x1]
  %v478 = vlaneseq
  %v479 = vshrl.u32 %v478, 7
  %v480 = vsub.s32 0, %v479
  %v481 = vrot.slane %v462, %v480
  %v482 = vlaneseq
  %v483 = vshrl.u32 %v482, 7
  %v484 = vsub.s32 0, %v483
  %v485 = vrot.slane %v463, %v484
  %v486 = vlaneseq
  %v487 = vshrl.u32 %v486, 7
  %v488 = vsub.s32 0, %v487
  %v489 = vrot.slane %v464, %v488
  %v490 = vlaneseq
  %v491 = vshrl.u32 %v490, 7
  %v492 = vsub.s32 0, %v491
  %v493 = vrot.slane %v465, %v492
  %v494 = vlaneseq
  %v495 = vshrl.u32 %v494, 7
  %v496 = vsub.s32 0, %v495
  %v497 = vrot.slane %v466, %v496
  %v498 = vlaneseq
  %v499 = vshrl.u32 %v498, 7
  %v500 = vsub.s32 0, %v499
  %v501 = vrot.slane %v467, %v500
  %v502 = vlaneseq
  %v503 = vshrl.u32 %v502, 7
  %v504 = vsub.s32 0, %v503
  %v505 = vrot.slane %v468, %v504
  %v506 = vlaneseq
  %v507 = vshrl.u32 %v506, 7
  %v508 = vsub.s32 0, %v507
  %v509 = vrot.slane %v469, %v508
  %v518 = vmin.f32 %v367, %v481
  %v519 = vmin.f32 %v372, %v485
  %v520 = vmin.f32 %v377, %v489
  %v521 = vmin.f32 %v382, %v493
  %v522 = vmin.f32 %v387, %v497
  %v523 = vmin.f32 %v392, %v501
  %v524 = vmin.f32 %v397, %v505
  %v525 = vmin.f32 %v402, %v509
  %v526 = vmax.f32 %v318, %v424
  %v527 = vmax.f32 %v323, %v428
  %v528 = vmax.f32 %v328, %v432
  %v529 = vmax.f32 %v333, %v436
  %v530 = vmax.f32 %v338, %v440
  %v531 = vmax.f32 %v343, %v444
  %v532 = vmax.f32 %v348, %v448
  %v533 = vmax.f32 %v353, %v452
  %v534 = vsub.f32 %v518, %v526
  %v535 = vsub.f32 %v519, %v527
  %v536 = vsub.f32 %v520, %v528
  %v537 = vsub.f32 %v521, %v529
  %v538 = vsub.f32 %v522, %v530
  %v539 = vsub.f32 %v523, %v531
  %v540 = vsub.f32 %v524, %v532
  %v541 = vsub.f32 %v525, %v533
  %v542 = vadd.f32 %v534, 1.0
  %v543 = vadd.f32 %v535, 1.0
  %v544 = vadd.f32 %v536, 1.0
  %v545 = vadd.f32 %v537, 1.0
  %v546 = vadd.f32 %v538, 1.0
  %v547 = vadd.f32 %v539, 1.0
  %v548 = vadd.f32 %v540, 1.0
  %v549 = vadd.f32 %v541, 1.0
  %v550 = vmul.f32 %v250, %v542
  %v551 = vmul.f32 %v251, %v543
  %v552 = vmul.f32 %v252, %v544
  %v553 = vmul.f32 %v253, %v545
  %v554 = vmul.f32 %v254, %v546
  %v555 = vmul.f32 %v255, %v547
  %v556 = vmul.f32 %v256, %v548
  %v557 = vmul.f32 %v257, %v549
  %v558 = vsub.f32 %v367, %v318
  %v559 = vsub.f32 %v372, %v323
  %v560 = vsub.f32 %v377, %v328
  %v561 = vsub.f32 %v382, %v333
  %v562 = vsub.f32 %v387, %v338
  %v563 = vsub.f32 %v392, %v343
  %v564 = vsub.f32 %v397, %v348
  %v565 = vsub.f32 %v402, %v353
  %v566 = vadd.f32 %v558, 1.0
  %v567 = vadd.f32 %v559, 1.0
  %v568 = vadd.f32 %v560, 1.0
  %v569 = vadd.f32 %v561, 1.0
  %v570 = vadd.f32 %v562, 1.0
  %v571 = vadd.f32 %v563, 1.0
  %v572 = vadd.f32 %v564, 1.0
  %v573 = vadd.f32 %v565, 1.0
  %v574 = vmul.f32 %v266, %v566
  %v575 = vmul.f32 %v267, %v567
  %v576 = vmul.f32 %v268, %v568
  %v577 = vmul.f32 %v269, %v569
  %v578 = vmul.f32 %v270, %v570
  %v579 = vmul.f32 %v271, %v571
  %v580 = vmul.f32 %v272, %v572
  %v581 = vmul.f32 %v273, %v573
  %v582 = vsub.f32 %v481, %v424
  %v583 = vsub.f32 %v485, %v428
  %v584 = vsub.f32 %v489, %v432
  %v585 = vsub.f32 %v493, %v436
  %v586 = vsub.f32 %v497, %v440
  %v587 = vsub.f32 %v501, %v444
  %v588 = vsub.f32 %v505, %v448
  %v589 = vsub.f32 %v509, %v452
  %v590 = vadd.f32 %v582, 1.0
  %v591 = vadd.f32 %v583, 1.0
  %v592 = vadd.f32 %v584, 1.0
  %v593 = vadd.f32 %v585, 1.0
  %v594 = vadd.f32 %v586, 1.0
  %v595 = vadd.f32 %v587, 1.0
  %v596 = vadd.f32 %v588, 1.0
  %v597 = vadd.f32 %v589, 1.0
  %v598 = vmul.f32 %v282, %v590
  %v599 = vmul.f32 %v283, %v591
  %v600 = vmul.f32 %v284, %v592
  %v601 = vmul.f32 %v285, %v593
  %v602 = vmul.f32 %v286, %v594
  %v603 = vmul.f32 %v287, %v595
  %v604 = vmul.f32 %v288, %v596
  %v605 = vmul.f32 %v289, %v597
  %vm606 = vcmp.gt.f32.partialorder %v367, %v424
  %vm607 = vcmp.gt.f32.partialorder %v372, %v428
  %vm608 = vcmp.gt.f32.partialorder %v377, %v432
  %vm609 = vcmp.gt.f32.partialorder %v382, %v436
  %vm610 = vcmp.gt.f32.partialorder %v387, %v440
  %vm611 = vcmp.gt.f32.partialorder %v392, %v444
  %vm612 = vcmp.gt.f32.partialorder %v397, %v448
  %vm613 = vcmp.gt.f32.partialorder %v402, %v452
  %vm614 = vmor %vm290, %vm606
  %vm615 = vmor %vm291, %vm607
  %vm616 = vmor %vm292, %vm608
  %vm617 = vmor %vm293, %vm609
  %vm618 = vmor %vm294, %vm610
  %vm619 = vmor %vm295, %vm611
  %vm620 = vmor %vm296, %vm612
  %vm621 = vmor %vm297, %vm613
  %vm622 = vcmp.lt.f32.partialorder %v318, %v481
  %vm623 = vcmp.lt.f32.partialorder %v323, %v485
  %vm624 = vcmp.lt.f32.partialorder %v328, %v489
  %vm625 = vcmp.lt.f32.partialorder %v333, %v493
  %vm626 = vcmp.lt.f32.partialorder %v338, %v497
  %vm627 = vcmp.lt.f32.partialorder %v343, %v501
  %vm628 = vcmp.lt.f32.partialorder %v348, %v505
  %vm629 = vcmp.lt.f32.partialorder %v353, %v509
  %vm630 = vmor %vm298, %vm622
  %vm631 = vmor %vm299, %vm623
  %vm632 = vmor %vm300, %vm624
  %vm633 = vmor %vm301, %vm625
  %vm634 = vmor %vm302, %vm626
  %vm635 = vmor %vm303, %vm627
  %vm636 = vmor %vm304, %vm628
  %vm637 = vmor %vm305, %vm629
  %s638 = scalar_lea.vmem %s0, 128
  %v639 = vld [vmem:[%s638] sm:$0xff]
  %v640 = vld [vmem:[%s638 + $0x8] sm:$0xff]
  %v641 = vld [vmem:[%s638 + $0x10] sm:$0xff]
  %v642 = vld [vmem:[%s638 + $0x18] sm:$0xff]
  %v643 = vld [vmem:[%s638 + $0x20] sm:$0xff]
  %v644 = vld [vmem:[%s638 + $0x28] sm:$0xff]
  %v645 = vld [vmem:[%s638 + $0x30] sm:$0xff]
  %v646 = vld [vmem:[%s638 + $0x38] sm:$0xff]
  %648 = vset.pattern.permute.xlu0 0
  %649 = vperm.xlu0 %648, %v639
  %v650 = vpop.permute.xlu0 %649
  %653 = vset.pattern.permute.xlu0 0
  %654 = vperm.xlu0 %653, %v640
  %v655 = vpop.permute.xlu0 %654
  %658 = vset.pattern.permute.xlu0 0
  %659 = vperm.xlu0 %658, %v641
  %v660 = vpop.permute.xlu0 %659
  %663 = vset.pattern.permute.xlu0 0
  %664 = vperm.xlu0 %663, %v642
  %v665 = vpop.permute.xlu0 %664
  %668 = vset.pattern.permute.xlu0 0
  %669 = vperm.xlu0 %668, %v643
  %v670 = vpop.permute.xlu0 %669
  %673 = vset.pattern.permute.xlu0 0
  %674 = vperm.xlu0 %673, %v644
  %v675 = vpop.permute.xlu0 %674
  %678 = vset.pattern.permute.xlu0 0
  %679 = vperm.xlu0 %678, %v645
  %v680 = vpop.permute.xlu0 %679
  %683 = vset.pattern.permute.xlu0 0
  %684 = vperm.xlu0 %683, %v646
  %v685 = vpop.permute.xlu0 %684
  %s687 = scalar_lea.vmem %s0, 320
  %v688 = vld [vmem:[%s687] sm:$0xff]
  %v689 = vld [vmem:[%s687 + $0x8] sm:$0xff]
  %v690 = vld [vmem:[%s687 + $0x10] sm:$0xff]
  %v691 = vld [vmem:[%s687 + $0x18] sm:$0xff]
  %v692 = vld [vmem:[%s687 + $0x20] sm:$0xff]
  %v693 = vld [vmem:[%s687 + $0x28] sm:$0xff]
  %v694 = vld [vmem:[%s687 + $0x30] sm:$0xff]
  %v695 = vld [vmem:[%s687 + $0x38] sm:$0xff]
  %697 = vset.pattern.permute.xlu0 0
  %698 = vperm.xlu0 %697, %v688
  %v699 = vpop.permute.xlu0 %698
  %702 = vset.pattern.permute.xlu0 0
  %703 = vperm.xlu0 %702, %v689
  %v704 = vpop.permute.xlu0 %703
  %707 = vset.pattern.permute.xlu0 0
  %708 = vperm.xlu0 %707, %v690
  %v709 = vpop.permute.xlu0 %708
  %712 = vset.pattern.permute.xlu0 0
  %713 = vperm.xlu0 %712, %v691
  %v714 = vpop.permute.xlu0 %713
  %717 = vset.pattern.permute.xlu0 0
  %718 = vperm.xlu0 %717, %v692
  %v719 = vpop.permute.xlu0 %718
  %722 = vset.pattern.permute.xlu0 0
  %723 = vperm.xlu0 %722, %v693
  %v724 = vpop.permute.xlu0 %723
  %727 = vset.pattern.permute.xlu0 0
  %728 = vperm.xlu0 %727, %v694
  %v729 = vpop.permute.xlu0 %728
  %732 = vset.pattern.permute.xlu0 0
  %733 = vperm.xlu0 %732, %v695
  %v734 = vpop.permute.xlu0 %733
  %s736 = scalar_lea.vmem %s1, 16
  %v737 = vld [vmem:[%s736] sm:$0x1]
  %v738 = vld [vmem:[%s736 + $0x1] sm:$0x1]
  %v739 = vld [vmem:[%s736 + $0x2] sm:$0x1]
  %v740 = vld [vmem:[%s736 + $0x3] sm:$0x1]
  %v741 = vld [vmem:[%s736 + $0x4] sm:$0x1]
  %v742 = vld [vmem:[%s736 + $0x5] sm:$0x1]
  %v743 = vld [vmem:[%s736 + $0x6] sm:$0x1]
  %v744 = vld [vmem:[%s736 + $0x7] sm:$0x1]
  %v753 = vlaneseq
  %v754 = vshrl.u32 %v753, 7
  %v755 = vsub.s32 0, %v754
  %v756 = vrot.slane %v737, %v755
  %v757 = vlaneseq
  %v758 = vshrl.u32 %v757, 7
  %v759 = vsub.s32 0, %v758
  %v760 = vrot.slane %v738, %v759
  %v761 = vlaneseq
  %v762 = vshrl.u32 %v761, 7
  %v763 = vsub.s32 0, %v762
  %v764 = vrot.slane %v739, %v763
  %v765 = vlaneseq
  %v766 = vshrl.u32 %v765, 7
  %v767 = vsub.s32 0, %v766
  %v768 = vrot.slane %v740, %v767
  %v769 = vlaneseq
  %v770 = vshrl.u32 %v769, 7
  %v771 = vsub.s32 0, %v770
  %v772 = vrot.slane %v741, %v771
  %v773 = vlaneseq
  %v774 = vshrl.u32 %v773, 7
  %v775 = vsub.s32 0, %v774
  %v776 = vrot.slane %v742, %v775
  %v777 = vlaneseq
  %v778 = vshrl.u32 %v777, 7
  %v779 = vsub.s32 0, %v778
  %v780 = vrot.slane %v743, %v779
  %v781 = vlaneseq
  %v782 = vshrl.u32 %v781, 7
  %v783 = vsub.s32 0, %v782
  %v784 = vrot.slane %v744, %v783
  %s793 = scalar_lea.vmem %s1, 40
  %v794 = vld [vmem:[%s793] sm:$0x1]
  %v795 = vld [vmem:[%s793 + $0x1] sm:$0x1]
  %v796 = vld [vmem:[%s793 + $0x2] sm:$0x1]
  %v797 = vld [vmem:[%s793 + $0x3] sm:$0x1]
  %v798 = vld [vmem:[%s793 + $0x4] sm:$0x1]
  %v799 = vld [vmem:[%s793 + $0x5] sm:$0x1]
  %v800 = vld [vmem:[%s793 + $0x6] sm:$0x1]
  %v801 = vld [vmem:[%s793 + $0x7] sm:$0x1]
  %v810 = vlaneseq
  %v811 = vshrl.u32 %v810, 7
  %v812 = vsub.s32 0, %v811
  %v813 = vrot.slane %v794, %v812
  %v814 = vlaneseq
  %v815 = vshrl.u32 %v814, 7
  %v816 = vsub.s32 0, %v815
  %v817 = vrot.slane %v795, %v816
  %v818 = vlaneseq
  %v819 = vshrl.u32 %v818, 7
  %v820 = vsub.s32 0, %v819
  %v821 = vrot.slane %v796, %v820
  %v822 = vlaneseq
  %v823 = vshrl.u32 %v822, 7
  %v824 = vsub.s32 0, %v823
  %v825 = vrot.slane %v797, %v824
  %v826 = vlaneseq
  %v827 = vshrl.u32 %v826, 7
  %v828 = vsub.s32 0, %v827
  %v829 = vrot.slane %v798, %v828
  %v830 = vlaneseq
  %v831 = vshrl.u32 %v830, 7
  %v832 = vsub.s32 0, %v831
  %v833 = vrot.slane %v799, %v832
  %v834 = vlaneseq
  %v835 = vshrl.u32 %v834, 7
  %v836 = vsub.s32 0, %v835
  %v837 = vrot.slane %v800, %v836
  %v838 = vlaneseq
  %v839 = vshrl.u32 %v838, 7
  %v840 = vsub.s32 0, %v839
  %v841 = vrot.slane %v801, %v840
  %v850 = vmin.f32 %v699, %v813
  %v851 = vmin.f32 %v704, %v817
  %v852 = vmin.f32 %v709, %v821
  %v853 = vmin.f32 %v714, %v825
  %v854 = vmin.f32 %v719, %v829
  %v855 = vmin.f32 %v724, %v833
  %v856 = vmin.f32 %v729, %v837
  %v857 = vmin.f32 %v734, %v841
  %v858 = vmax.f32 %v650, %v756
  %v859 = vmax.f32 %v655, %v760
  %v860 = vmax.f32 %v660, %v764
  %v861 = vmax.f32 %v665, %v768
  %v862 = vmax.f32 %v670, %v772
  %v863 = vmax.f32 %v675, %v776
  %v864 = vmax.f32 %v680, %v780
  %v865 = vmax.f32 %v685, %v784
  %v866 = vsub.f32 %v850, %v858
  %v867 = vsub.f32 %v851, %v859
  %v868 = vsub.f32 %v852, %v860
  %v869 = vsub.f32 %v853, %v861
  %v870 = vsub.f32 %v854, %v862
  %v871 = vsub.f32 %v855, %v863
  %v872 = vsub.f32 %v856, %v864
  %v873 = vsub.f32 %v857, %v865
  %v874 = vadd.f32 %v866, 1.0
  %v875 = vadd.f32 %v867, 1.0
  %v876 = vadd.f32 %v868, 1.0
  %v877 = vadd.f32 %v869, 1.0
  %v878 = vadd.f32 %v870, 1.0
  %v879 = vadd.f32 %v871, 1.0
  %v880 = vadd.f32 %v872, 1.0
  %v881 = vadd.f32 %v873, 1.0
  %v882 = vmul.f32 %v550, %v874
  %v883 = vmul.f32 %v551, %v875
  %v884 = vmul.f32 %v552, %v876
  %v885 = vmul.f32 %v553, %v877
  %v886 = vmul.f32 %v554, %v878
  %v887 = vmul.f32 %v555, %v879
  %v888 = vmul.f32 %v556, %v880
  %v889 = vmul.f32 %v557, %v881
  %v890 = vsub.f32 %v699, %v650
  %v891 = vsub.f32 %v704, %v655
  %v892 = vsub.f32 %v709, %v660
  %v893 = vsub.f32 %v714, %v665
  %v894 = vsub.f32 %v719, %v670
  %v895 = vsub.f32 %v724, %v675
  %v896 = vsub.f32 %v729, %v680
  %v897 = vsub.f32 %v734, %v685
  %v898 = vadd.f32 %v890, 1.0
  %v899 = vadd.f32 %v891, 1.0
  %v900 = vadd.f32 %v892, 1.0
  %v901 = vadd.f32 %v893, 1.0
  %v902 = vadd.f32 %v894, 1.0
  %v903 = vadd.f32 %v895, 1.0
  %v904 = vadd.f32 %v896, 1.0
  %v905 = vadd.f32 %v897, 1.0
  %v906 = vmul.f32 %v574, %v898
  %v907 = vmul.f32 %v575, %v899
  %v908 = vmul.f32 %v576, %v900
  %v909 = vmul.f32 %v577, %v901
  %v910 = vmul.f32 %v578, %v902
  %v911 = vmul.f32 %v579, %v903
  %v912 = vmul.f32 %v580, %v904
  %v913 = vmul.f32 %v581, %v905
  %v914 = vsub.f32 %v813, %v756
  %v915 = vsub.f32 %v817, %v760
  %v916 = vsub.f32 %v821, %v764
  %v917 = vsub.f32 %v825, %v768
  %v918 = vsub.f32 %v829, %v772
  %v919 = vsub.f32 %v833, %v776
  %v920 = vsub.f32 %v837, %v780
  %v921 = vsub.f32 %v841, %v784
  %v922 = vadd.f32 %v914, 1.0
  %v923 = vadd.f32 %v915, 1.0
  %v924 = vadd.f32 %v916, 1.0
  %v925 = vadd.f32 %v917, 1.0
  %v926 = vadd.f32 %v918, 1.0
  %v927 = vadd.f32 %v919, 1.0
  %v928 = vadd.f32 %v920, 1.0
  %v929 = vadd.f32 %v921, 1.0
  %v930 = vmul.f32 %v598, %v922
  %v931 = vmul.f32 %v599, %v923
  %v932 = vmul.f32 %v600, %v924
  %v933 = vmul.f32 %v601, %v925
  %v934 = vmul.f32 %v602, %v926
  %v935 = vmul.f32 %v603, %v927
  %v936 = vmul.f32 %v604, %v928
  %v937 = vmul.f32 %v605, %v929
  %vm938 = vcmp.gt.f32.partialorder %v699, %v756
  %vm939 = vcmp.gt.f32.partialorder %v704, %v760
  %vm940 = vcmp.gt.f32.partialorder %v709, %v764
  %vm941 = vcmp.gt.f32.partialorder %v714, %v768
  %vm942 = vcmp.gt.f32.partialorder %v719, %v772
  %vm943 = vcmp.gt.f32.partialorder %v724, %v776
  %vm944 = vcmp.gt.f32.partialorder %v729, %v780
  %vm945 = vcmp.gt.f32.partialorder %v734, %v784
  %vm946 = vmor %vm614, %vm938
  %vm947 = vmor %vm615, %vm939
  %vm948 = vmor %vm616, %vm940
  %vm949 = vmor %vm617, %vm941
  %vm950 = vmor %vm618, %vm942
  %vm951 = vmor %vm619, %vm943
  %vm952 = vmor %vm620, %vm944
  %vm953 = vmor %vm621, %vm945
  %vm954 = vcmp.lt.f32.partialorder %v650, %v813
  %vm955 = vcmp.lt.f32.partialorder %v655, %v817
  %vm956 = vcmp.lt.f32.partialorder %v660, %v821
  %vm957 = vcmp.lt.f32.partialorder %v665, %v825
  %vm958 = vcmp.lt.f32.partialorder %v670, %v829
  %vm959 = vcmp.lt.f32.partialorder %v675, %v833
  %vm960 = vcmp.lt.f32.partialorder %v680, %v837
  %vm961 = vcmp.lt.f32.partialorder %v685, %v841
  %vm962 = vmor %vm630, %vm954
  %vm963 = vmor %vm631, %vm955
  %vm964 = vmor %vm632, %vm956
  %vm965 = vmor %vm633, %vm957
  %vm966 = vmor %vm634, %vm958
  %vm967 = vmor %vm635, %vm959
  %vm968 = vmor %vm636, %vm960
  %vm969 = vmor %vm637, %vm961
  %v970 = vadd.f32 %v906, %v930
  %v971 = vadd.f32 %v907, %v931
  %v972 = vadd.f32 %v908, %v932
  %v973 = vadd.f32 %v909, %v933
  %v974 = vadd.f32 %v910, %v934
  %v975 = vadd.f32 %v911, %v935
  %v976 = vadd.f32 %v912, %v936
  %v977 = vadd.f32 %v913, %v937
  %v978 = vsub.f32 %v970, %v882
  %v979 = vsub.f32 %v971, %v883
  %v980 = vsub.f32 %v972, %v884
  %v981 = vsub.f32 %v973, %v885
  %v982 = vsub.f32 %v974, %v886
  %v983 = vsub.f32 %v975, %v887
  %v984 = vsub.f32 %v976, %v888
  %v985 = vsub.f32 %v977, %v889
  %v986 = vmax.f32 %v978, 1e-06
  %v987 = vmax.f32 %v979, 1e-06
  %v988 = vmax.f32 %v980, 1e-06
  %v989 = vmax.f32 %v981, 1e-06
  %v990 = vmax.f32 %v982, 1e-06
  %v991 = vmax.f32 %v983, 1e-06
  %v992 = vmax.f32 %v984, 1e-06
  %v993 = vmax.f32 %v985, 1e-06
  %v994 = vrcp.pop %v986
  %v995 = vrcp.pop %v987
  %v996 = vrcp.pop %v988
  %v997 = vrcp.pop %v989
  %v998 = vrcp.pop %v990
  %v999 = vrcp.pop %v991
  %v1000 = vrcp.pop %v992
  %v1001 = vrcp.pop %v993
  %v1002 = vmul.f32 %v882, %v994
  %v1003 = vmul.f32 %v883, %v995
  %v1004 = vmul.f32 %v884, %v996
  %v1005 = vmul.f32 %v885, %v997
  %v1006 = vmul.f32 %v886, %v998
  %v1007 = vmul.f32 %v887, %v999
  %v1008 = vmul.f32 %v888, %v1000
  %v1009 = vmul.f32 %v889, %v1001
  %vm1010 = vmand %vm946, %vm962
  %vm1011 = vmand %vm947, %vm963
  %vm1012 = vmand %vm948, %vm964
  %vm1013 = vmand %vm949, %vm965
  %vm1014 = vmand %vm950, %vm966
  %vm1015 = vmand %vm951, %vm967
  %vm1016 = vmand %vm952, %vm968
  %vm1017 = vmand %vm953, %vm969
  %v1018 = vsel %vm1010, %v1002, 0.0
  %v1019 = vsel %vm1011, %v1003, 0.0
  %v1020 = vsel %vm1012, %v1004, 0.0
  %v1021 = vsel %vm1013, %v1005, 0.0
  %v1022 = vsel %vm1014, %v1006, 0.0
  %v1023 = vsel %vm1015, %v1007, 0.0
  %v1024 = vsel %vm1016, %v1008, 0.0
  %v1025 = vsel %vm1017, %v1009, 0.0
  %1026 = vmax.xlane.f32.xlu0 %v1018
  %v1027 = vpop.xlane.xlu0 %1026
  %1028 = vmax.xlane.f32.xlu0 %v1019
  %v1029 = vpop.xlane.xlu0 %1028
  %1030 = vmax.xlane.f32.xlu0 %v1020
  %v1031 = vpop.xlane.xlu0 %1030
  %1032 = vmax.xlane.f32.xlu0 %v1021
  %v1033 = vpop.xlane.xlu0 %1032
  %1034 = vmax.xlane.f32.xlu0 %v1022
  %v1035 = vpop.xlane.xlu0 %1034
  %1036 = vmax.xlane.f32.xlu0 %v1023
  %v1037 = vpop.xlane.xlu0 %1036
  %1038 = vmax.xlane.f32.xlu0 %v1024
  %v1039 = vpop.xlane.xlu0 %1038
  %1040 = vmax.xlane.f32.xlu0 %v1025
  %v1041 = vpop.xlane.xlu0 %1040
  %v1042 = vlaneseq
  %v1043 = vand.u32 %v1042, 127
  %vm1044 = vcmp.eq.f32.partialorder %v1018, %v1027
  %vm1045 = vcmp.eq.f32.partialorder %v1019, %v1029
  %vm1046 = vcmp.eq.f32.partialorder %v1020, %v1031
  %vm1047 = vcmp.eq.f32.partialorder %v1021, %v1033
  %vm1048 = vcmp.eq.f32.partialorder %v1022, %v1035
  %vm1049 = vcmp.eq.f32.partialorder %v1023, %v1037
  %vm1050 = vcmp.eq.f32.partialorder %v1024, %v1039
  %vm1051 = vcmp.eq.f32.partialorder %v1025, %v1041
  %v1052 = vsel %vm1044, %v1043, 128
  %v1053 = vsel %vm1045, %v1043, 128
  %v1054 = vsel %vm1046, %v1043, 128
  %v1055 = vsel %vm1047, %v1043, 128
  %v1056 = vsel %vm1048, %v1043, 128
  %v1057 = vsel %vm1049, %v1043, 128
  %v1058 = vsel %vm1050, %v1043, 128
  %v1059 = vsel %vm1051, %v1043, 128
  %v1060 = vand.u32 %v1052, 65535
  %v1061 = vshra.s32 %v1052, 16
  %v1062 = vcvt.s32.f32 %v1060
  %v1063 = vcvt.s32.f32 %v1061
  %1064 = vmin.xlane.f32.xlu0 %v1063
  %v1065 = vpop.xlane.xlu0 %1064
  %vm1066 = vcmp.eq.f32.partialorder %v1063, %v1065
  %v1067 = vsel %vm1066, %v1062, inf
  %1068 = vmin.xlane.f32.xlu0 %v1067
  %v1069 = vpop.xlane.xlu0 %1068
  %v1070 = vcvt.f32.s32 %v1069
  %v1071 = vcvt.f32.s32 %v1065
  %v1072 = vshll.u32 %v1071, 16
  %v1073 = vadd.s32 %v1072, %v1070
  %v1074 = vand.u32 %v1053, 65535
  %v1075 = vshra.s32 %v1053, 16
  %v1076 = vcvt.s32.f32 %v1074
  %v1077 = vcvt.s32.f32 %v1075
  %1078 = vmin.xlane.f32.xlu0 %v1077
  %v1079 = vpop.xlane.xlu0 %1078
  %vm1080 = vcmp.eq.f32.partialorder %v1077, %v1079
  %v1081 = vsel %vm1080, %v1076, inf
  %1082 = vmin.xlane.f32.xlu0 %v1081
  %v1083 = vpop.xlane.xlu0 %1082
  %v1084 = vcvt.f32.s32 %v1083
  %v1085 = vcvt.f32.s32 %v1079
  %v1086 = vshll.u32 %v1085, 16
  %v1087 = vadd.s32 %v1086, %v1084
  %v1088 = vand.u32 %v1054, 65535
  %v1089 = vshra.s32 %v1054, 16
  %v1090 = vcvt.s32.f32 %v1088
  %v1091 = vcvt.s32.f32 %v1089
  %1092 = vmin.xlane.f32.xlu0 %v1091
  %v1093 = vpop.xlane.xlu0 %1092
  %vm1094 = vcmp.eq.f32.partialorder %v1091, %v1093
  %v1095 = vsel %vm1094, %v1090, inf
  %1096 = vmin.xlane.f32.xlu0 %v1095
  %v1097 = vpop.xlane.xlu0 %1096
  %v1098 = vcvt.f32.s32 %v1097
  %v1099 = vcvt.f32.s32 %v1093
  %v1100 = vshll.u32 %v1099, 16
  %v1101 = vadd.s32 %v1100, %v1098
  %v1102 = vand.u32 %v1055, 65535
  %v1103 = vshra.s32 %v1055, 16
  %v1104 = vcvt.s32.f32 %v1102
  %v1105 = vcvt.s32.f32 %v1103
  %1106 = vmin.xlane.f32.xlu0 %v1105
  %v1107 = vpop.xlane.xlu0 %1106
  %vm1108 = vcmp.eq.f32.partialorder %v1105, %v1107
  %v1109 = vsel %vm1108, %v1104, inf
  %1110 = vmin.xlane.f32.xlu0 %v1109
  %v1111 = vpop.xlane.xlu0 %1110
  %v1112 = vcvt.f32.s32 %v1111
  %v1113 = vcvt.f32.s32 %v1107
  %v1114 = vshll.u32 %v1113, 16
  %v1115 = vadd.s32 %v1114, %v1112
  %v1116 = vand.u32 %v1056, 65535
  %v1117 = vshra.s32 %v1056, 16
  %v1118 = vcvt.s32.f32 %v1116
  %v1119 = vcvt.s32.f32 %v1117
  %1120 = vmin.xlane.f32.xlu0 %v1119
  %v1121 = vpop.xlane.xlu0 %1120
  %vm1122 = vcmp.eq.f32.partialorder %v1119, %v1121
  %v1123 = vsel %vm1122, %v1118, inf
  %1124 = vmin.xlane.f32.xlu0 %v1123
  %v1125 = vpop.xlane.xlu0 %1124
  %v1126 = vcvt.f32.s32 %v1125
  %v1127 = vcvt.f32.s32 %v1121
  %v1128 = vshll.u32 %v1127, 16
  %v1129 = vadd.s32 %v1128, %v1126
  %v1130 = vand.u32 %v1057, 65535
  %v1131 = vshra.s32 %v1057, 16
  %v1132 = vcvt.s32.f32 %v1130
  %v1133 = vcvt.s32.f32 %v1131
  %1134 = vmin.xlane.f32.xlu0 %v1133
  %v1135 = vpop.xlane.xlu0 %1134
  %vm1136 = vcmp.eq.f32.partialorder %v1133, %v1135
  %v1137 = vsel %vm1136, %v1132, inf
  %1138 = vmin.xlane.f32.xlu0 %v1137
  %v1139 = vpop.xlane.xlu0 %1138
  %v1140 = vcvt.f32.s32 %v1139
  %v1141 = vcvt.f32.s32 %v1135
  %v1142 = vshll.u32 %v1141, 16
  %v1143 = vadd.s32 %v1142, %v1140
  %v1144 = vand.u32 %v1058, 65535
  %v1145 = vshra.s32 %v1058, 16
  %v1146 = vcvt.s32.f32 %v1144
  %v1147 = vcvt.s32.f32 %v1145
  %1148 = vmin.xlane.f32.xlu0 %v1147
  %v1149 = vpop.xlane.xlu0 %1148
  %vm1150 = vcmp.eq.f32.partialorder %v1147, %v1149
  %v1151 = vsel %vm1150, %v1146, inf
  %1152 = vmin.xlane.f32.xlu0 %v1151
  %v1153 = vpop.xlane.xlu0 %1152
  %v1154 = vcvt.f32.s32 %v1153
  %v1155 = vcvt.f32.s32 %v1149
  %v1156 = vshll.u32 %v1155, 16
  %v1157 = vadd.s32 %v1156, %v1154
  %v1158 = vand.u32 %v1059, 65535
  %v1159 = vshra.s32 %v1059, 16
  %v1160 = vcvt.s32.f32 %v1158
  %v1161 = vcvt.s32.f32 %v1159
  %1162 = vmin.xlane.f32.xlu0 %v1161
  %v1163 = vpop.xlane.xlu0 %1162
  %vm1164 = vcmp.eq.f32.partialorder %v1161, %v1163
  %v1165 = vsel %vm1164, %v1160, inf
  %1166 = vmin.xlane.f32.xlu0 %v1165
  %v1167 = vpop.xlane.xlu0 %1166
  %v1168 = vcvt.f32.s32 %v1167
  %v1169 = vcvt.f32.s32 %v1163
  %v1170 = vshll.u32 %v1169, 16
  %v1171 = vadd.s32 %v1170, %v1168
  %v1172 = vld [vmem:[%s2] sm:$0x1]
  %v1173 = vld [vmem:[%s2 + $0x1] sm:$0x1]
  %v1174 = vld [vmem:[%s2 + $0x2] sm:$0x1]
  %v1175 = vld [vmem:[%s2 + $0x3] sm:$0x1]
  %v1176 = vld [vmem:[%s2 + $0x4] sm:$0x1]
  %v1177 = vld [vmem:[%s2 + $0x5] sm:$0x1]
  %v1178 = vld [vmem:[%s2 + $0x6] sm:$0x1]
  %v1179 = vld [vmem:[%s2 + $0x7] sm:$0x1]
  %v1188 = vlaneseq
  %v1189 = vshrl.u32 %v1188, 7
  %v1190 = vsub.s32 0, %v1189
  %v1191 = vrot.slane %v1172, %v1190
  %v1192 = vlaneseq
  %v1193 = vshrl.u32 %v1192, 7
  %v1194 = vsub.s32 0, %v1193
  %v1195 = vrot.slane %v1173, %v1194
  %v1196 = vlaneseq
  %v1197 = vshrl.u32 %v1196, 7
  %v1198 = vsub.s32 0, %v1197
  %v1199 = vrot.slane %v1174, %v1198
  %v1200 = vlaneseq
  %v1201 = vshrl.u32 %v1200, 7
  %v1202 = vsub.s32 0, %v1201
  %v1203 = vrot.slane %v1175, %v1202
  %v1204 = vlaneseq
  %v1205 = vshrl.u32 %v1204, 7
  %v1206 = vsub.s32 0, %v1205
  %v1207 = vrot.slane %v1176, %v1206
  %v1208 = vlaneseq
  %v1209 = vshrl.u32 %v1208, 7
  %v1210 = vsub.s32 0, %v1209
  %v1211 = vrot.slane %v1177, %v1210
  %v1212 = vlaneseq
  %v1213 = vshrl.u32 %v1212, 7
  %v1214 = vsub.s32 0, %v1213
  %v1215 = vrot.slane %v1178, %v1214
  %v1216 = vlaneseq
  %v1217 = vshrl.u32 %v1216, 7
  %v1218 = vsub.s32 0, %v1217
  %v1219 = vrot.slane %v1179, %v1218
  %vm1228 = vcmp.eq.s32.totalorder %v1043, %v1073
  %vm1229 = vcmp.eq.s32.totalorder %v1043, %v1087
  %vm1230 = vcmp.eq.s32.totalorder %v1043, %v1101
  %vm1231 = vcmp.eq.s32.totalorder %v1043, %v1115
  %vm1232 = vcmp.eq.s32.totalorder %v1043, %v1129
  %vm1233 = vcmp.eq.s32.totalorder %v1043, %v1143
  %vm1234 = vcmp.eq.s32.totalorder %v1043, %v1157
  %vm1235 = vcmp.eq.s32.totalorder %v1043, %v1171
  %v1236 = vsel %vm1228, %v1191, -inf
  %v1237 = vsel %vm1229, %v1195, -inf
  %v1238 = vsel %vm1230, %v1199, -inf
  %v1239 = vsel %vm1231, %v1203, -inf
  %v1240 = vsel %vm1232, %v1207, -inf
  %v1241 = vsel %vm1233, %v1211, -inf
  %v1242 = vsel %vm1234, %v1215, -inf
  %v1243 = vsel %vm1235, %v1219, -inf
  %1244 = vmax.xlane.f32.xlu0 %v1236
  %v1245 = vpop.xlane.xlu0 %1244
  %1246 = vmax.xlane.f32.xlu0 %v1237
  %v1247 = vpop.xlane.xlu0 %1246
  %1248 = vmax.xlane.f32.xlu0 %v1238
  %v1249 = vpop.xlane.xlu0 %1248
  %1250 = vmax.xlane.f32.xlu0 %v1239
  %v1251 = vpop.xlane.xlu0 %1250
  %1252 = vmax.xlane.f32.xlu0 %v1240
  %v1253 = vpop.xlane.xlu0 %1252
  %1254 = vmax.xlane.f32.xlu0 %v1241
  %v1255 = vpop.xlane.xlu0 %1254
  %1256 = vmax.xlane.f32.xlu0 %v1242
  %v1257 = vpop.xlane.xlu0 %1256
  %1258 = vmax.xlane.f32.xlu0 %v1243
  %v1259 = vpop.xlane.xlu0 %1258
  %vm1260 = vcmask 7168
  %1261 = vst.msk [vmem:[%s3] sm:$0xff] %vm1260, %v1027
  %1262 = vst.msk [vmem:[%s3 + $0x8] sm:$0xff] %vm1260, %v1029
  %1263 = vst.msk [vmem:[%s3 + $0x10] sm:$0xff] %vm1260, %v1031
  %1264 = vst.msk [vmem:[%s3 + $0x18] sm:$0xff] %vm1260, %v1033
  %1265 = vst.msk [vmem:[%s3 + $0x20] sm:$0xff] %vm1260, %v1035
  %1266 = vst.msk [vmem:[%s3 + $0x28] sm:$0xff] %vm1260, %v1037
  %1267 = vst.msk [vmem:[%s3 + $0x30] sm:$0xff] %vm1260, %v1039
  %1268 = vst.msk [vmem:[%s3 + $0x38] sm:$0xff] %vm1260, %v1041
  %1269 = vst.msk [vmem:[%s4] sm:$0xff] %vm1260, %v1245
  %1270 = vst.msk [vmem:[%s4 + $0x8] sm:$0xff] %vm1260, %v1247
  %1271 = vst.msk [vmem:[%s4 + $0x10] sm:$0xff] %vm1260, %v1249
  %1272 = vst.msk [vmem:[%s4 + $0x18] sm:$0xff] %vm1260, %v1251
  %1273 = vst.msk [vmem:[%s4 + $0x20] sm:$0xff] %vm1260, %v1253
  %1274 = vst.msk [vmem:[%s4 + $0x28] sm:$0xff] %vm1260, %v1255
  %1275 = vst.msk [vmem:[%s4 + $0x30] sm:$0xff] %vm1260, %v1257
  %1276 = vst.msk [vmem:[%s4 + $0x38] sm:$0xff] %vm1260, %v1259
  // Predicated region
  $region14: #{_map_from_padded.1} parent=0 // pred_check
    _
  $region15: #{_map_from_padded.1} parent=0 // pred_check_branch
    %1278 = sbr.rel (0) target = $region17
  $region16: #{_map_from_padded.1} parent=0 // pred_region
    _
  $region17: #{_map_from_padded.1} parent=0 // pred_fallthru
    _
  // Predicated region
  $region18: #{_map_from_padded.1} parent=0 // pred_check
    _
  $region19: #{_map_from_padded.1} parent=0 // pred_check_branch
    %1280 = sbr.rel (0) target = $region21
  $region20: #{_map_from_padded.1} parent=0 // pred_region
    _
  $region21: #{_map_from_padded.1} parent=0 // pred_fallthru
    _
  // Predicated region
  $region22: #{_map_from_padded.1} parent=0 // pred_check
    _
  $region23: #{_map_from_padded.1} parent=0 // pred_check_branch
    %1282 = sbr.rel (0) target = $region25
  $region24: #{_map_from_padded.1} parent=0 // pred_region
    _
  $region25: #{_map_from_padded.1} parent=0 // pred_fallthru
    _
  // Predicated region
  $region26: #{_map_from_padded.1} parent=0 // pred_check
    _
  $region27: #{_map_from_padded.1} parent=0 // pred_check_branch
    %1284 = sbr.rel (0) target = $region29
  $region28: #{_map_from_padded.1} parent=0 // pred_region
    _
  $region29: #{_map_from_padded.1} parent=0 // pred_fallthru
    _

</llo_original>
